<compile_context>
chip_gen: v7x
topology: tpu7x:2x2x1
jax: 0.10.0
libtpu: 0.0.40
codegen_flags: <defaults>
</compile_context>

<pallas_src>
import functools
import math

import numpy as np
import jax
import jax.numpy as jnp
from jax.experimental import pallas as pl
from jax.experimental.pallas import tpu as pltpu

LN_EPS = 1e-5
NEG_INF = -1e30  # finite mask value (no exp(-inf - -inf) NaN risk)


def _layernorm(x, gamma, beta):
    mu = jnp.mean(x, axis=-1, keepdims=True)
    var = jnp.mean((x - mu) ** 2, axis=-1, keepdims=True)
    return (x - mu) * jax.lax.rsqrt(var + LN_EPS) * gamma + beta


# ---------------------------------------------------------------------------
# Pallas kernel: one grid step = one transformer block on one batch row-tile.
# Grid = (n_row_tiles [parallel], n_blocks [arbitrary]).
# Residual stream lives in resid_ref (VMEM scratch) across the block axis.
# ---------------------------------------------------------------------------
def gpt_kernel(x_ref, wqkv_ref, wo_ref, bo_ref,
               g1_ref, b1_ref, g2_ref, b2_ref,
               we_ref, be_ref, wc_ref, bc_ref,
               gf_ref, bf_ref, wlm_ref, blm_ref,
               out_ref, resid_ref, *, B_tile, T, H, n_heads):
    """x_ref: (R, H) f32 embedded rows of this row-tile (R = B_tile*T).
    Per-block weights carry a leading block axis of size 1 (stream one block's
    weights per grid step).  MXU weights (wqkv/wo/we/wc/wlm) are bf16, attention
    scale pre-folded into wqkv's Q columns.  out_ref: (R, Vpad) f32 logits,
    written only on the last block step."""
    blk = pl.program_id(1)
    n_blocks = pl.num_programs(1)
    R = B_tile * T
    hs = H // n_heads

    # Initialise the persistent residual scratch from the embeddings.
    @pl.when(blk == 0)
    def _():
        resid_ref[...] = x_ref[...]

    x = resid_ref[...]                                        # (R, H) f32

    rows = jax.lax.broadcasted_iota(jnp.int32, (T, T), 0)
    cols = jax.lax.broadcasted_iota(jnp.int32, (T, T), 1)
    causal = (rows >= cols)[None]                             # (1, T, T)

    # ---- multi-head causal self-attention on layer_norm_1(x) ----
    xn = _layernorm(x, g1_ref[0], b1_ref[0])
    # single fused QKV projection: (R, H) @ (H, 3H); scale already in Q weights
    qkv = jnp.dot(xn.astype(jnp.bfloat16), wqkv_ref[0],
                  preferred_element_type=jnp.float32)         # (R, 3H) f32
    qkv_b = qkv.astype(jnp.bfloat16)                          # cast once
    q_all = qkv_b[:, :H].reshape(B_tile, T, H)
    k_all = qkv_b[:, H:2 * H].reshape(B_tile, T, H)
    v_all = qkv_b[:, 2 * H:].reshape(B_tile, T, H)

    head_outs = []
    for h in range(n_heads):                                  # static, small
        sl = slice(h * hs, (h + 1) * hs)
        s = jnp.einsum('bqd,bkd->bqk', q_all[:, :, sl], k_all[:, :, sl],
                       preferred_element_type=jnp.float32)    # (B_tile, T, T)
        s = jnp.where(causal, s, NEG_INF)
        s = s - jnp.max(s, axis=-1, keepdims=True)
        p = jnp.exp(s)
        p = p * pl.reciprocal(jnp.sum(p, axis=-1, keepdims=True), approx=True)
        o_h = jnp.einsum('bqk,bkd->bqd', p.astype(jnp.bfloat16),
                         v_all[:, :, sl],
                         preferred_element_type=jnp.float32)  # (B_tile, T, hs)
        head_outs.append(o_h.reshape(R, hs))
    # one H-contraction output projection instead of per-head Wo folds
    mh = jnp.concatenate(head_outs, axis=-1).astype(jnp.bfloat16)   # (R, H)
    attn = jnp.dot(mh, wo_ref[0], preferred_element_type=jnp.float32) + bo_ref[0]
    x = x + attn                                              # residual 1

    # ---- feed-forward on layer_norm_2(x) ----
    xn2 = _layernorm(x, g2_ref[0], b2_ref[0])
    hid = jnp.dot(xn2.astype(jnp.bfloat16), we_ref[0],
                  preferred_element_type=jnp.float32) + be_ref[0]
    hid = jnp.maximum(hid, 0.0)
    ffn = jnp.dot(hid.astype(jnp.bfloat16), wc_ref[0],
                  preferred_element_type=jnp.float32) + bc_ref[0]
    x = x + ffn                                               # residual 2

    resid_ref[...] = x                                        # carry to next block

    # ---- final LayerNorm + LM head (lane-dense padded vocab), last block only
    @pl.when(blk == n_blocks - 1)
    def _():
        xf = _layernorm(x, gf_ref[...], bf_ref[...])
        out_ref[...] = jnp.dot(xf.astype(jnp.bfloat16), wlm_ref[...],
                               preferred_element_type=jnp.float32) + blm_ref[...]


# ---------------------------------------------------------------------------
# pallas_call wrapper
# ---------------------------------------------------------------------------
def _blk_spec(a):
    """Per-block weight: stream one block slice per inner grid step."""
    return pl.BlockSpec((1,) + a.shape[1:],
                        lambda r, blk, _n=a.ndim - 1: (blk,) + (0,) * _n)


def _const_spec(a):
    """Resident-for-the-whole-call arrays (final LN / LM head)."""
    return pl.BlockSpec(a.shape, lambda r, blk, _n=a.ndim: (0,) * _n)


def _vmem_limit_bytes(params, R, Vpad, H):
    def per_block_nbytes(a):                # bytes of one block slice
        return (a.size // a.shape[0]) * a.dtype.itemsize

    per_block = sum(per_block_nbytes(params[k]) for k in
                    ("wqkv", "wo", "bo", "g1", "b1", "g2", "b2",
                     "we", "be", "wc", "bc"))
    F = params["we"].shape[-1]
    resident = (2 * R * H * 4                       # input block (dbl-buffered)
                + 2 * R * Vpad * 4                  # output block (dbl-buffered)
                + R * H * 4                         # residual scratch
                + params["w_lm"].size * 2 + params["b_lm"].size * 4
                + params["g_f"].size * 4 + params["b_f"].size * 4)
    act = 8 * R * max(3 * H, F, Vpad) * 4           # activation headroom
    est = 2 * per_block + resident + act
    # never below the default scoped limit; never above v7x's 64 MiB physical
    return int(min(max(2 * est, 32 << 20), 64 << 20))


def transformer_forward(tokens, params, b_tile=1):
    """Forward pass equivalent to Transformer.forward(input, target=None)."""
    B, T = tokens.shape
    H = params["tok_emb"].shape[1]
    V = params["vocab_size"]
    Vpad = params["w_lm"].shape[1]
    n_heads = params["n_heads"]
    n_blocks = params["wqkv"].shape[0]
    hs = H // n_heads

    B_tile = b_tile
    assert B % B_tile == 0
    n_row_tiles = B // B_tile
    R = B_tile * T
    assert (R % 8 == 0) or (n_row_tiles == 1), "row tile must satisfy sublane tiling"

    # Embedding gathers + add are glue (plain JAX); everything else is fused
    # into one Pallas kernel that keeps the residual stream resident in VMEM.
    x = params["tok_emb"][tokens] + params["pos_emb"][:T][None, :, :]
    x2d = x.reshape(B * T, H).astype(jnp.float32)

    # Fold the 1/sqrt(head_size) attention scale into the Q columns of the
    # fused QKV weight (one tiny op outside the kernel; in a real deployment
    # this would be baked into the stored weights).
    q_scale = jnp.concatenate(
        [jnp.full((H,), 1.0 / math.sqrt(hs), jnp.float32),
         jnp.ones((2 * H,), jnp.float32)])[None, None, :]
    wqkv_scaled = (params["wqkv"].astype(jnp.float32) * q_scale).astype(jnp.bfloat16)

    operands = (x2d, wqkv_scaled, params["wo"], params["bo"],
                params["g1"], params["b1"], params["g2"], params["b2"],
                params["we"], params["be"], params["wc"], params["bc"],
                params["g_f"], params["b_f"], params["w_lm"], params["b_lm"])

    in_specs = ([pl.BlockSpec((R, H), lambda r, blk: (r, 0))]
                + [_blk_spec(a) for a in operands[1:12]]
                + [_const_spec(a) for a in operands[12:]])

    kernel = functools.partial(gpt_kernel, B_tile=B_tile, T=T, H=H,
                               n_heads=n_heads)

    out = pl.pallas_call(
        kernel,
        out_shape=jax.ShapeDtypeStruct((B * T, Vpad), jnp.float32),
        grid=(n_row_tiles, n_blocks),
        in_specs=in_specs,
        out_specs=pl.BlockSpec((R, Vpad), lambda r, blk: (r, 0)),
        scratch_shapes=[pltpu.VMEM((R, H), jnp.float32)],
        compiler_params=pltpu.CompilerParams(
            dimension_semantics=("parallel", "arbitrary"),
            vmem_limit_bytes=_vmem_limit_bytes(params, R, Vpad, H)),
    )(*operands)

    logits = out[:, :V].reshape(B, T, V)
    return logits, None


# ---------------------------------------------------------------------------
# deterministic parameter init (weights pre-transposed: x @ W + b)
# ---------------------------------------------------------------------------
def make_params(key, vocab_size, hidden_dim, sequence_length, n_heads, n_blocks,
                inflation_factor=4):
    H = hidden_dim
    F = H * inflation_factor
    Vpad = max(128, ((vocab_size + 127) // 128) * 128)   # lane-dense LM head
    keys = iter(jax.random.split(key, 16))

    def rnd(shape, fan_in=None):
        w = jax.random.normal(next(keys), shape, dtype=jnp.float32)
        if fan_in is not None:
            w = w / math.sqrt(fan_in)
        return w

    w_lm = jnp.zeros((H, Vpad), jnp.float32).at[:, :vocab_size].set(
        rnd((H, vocab_size), fan_in=H))
    b_lm = jnp.zeros((1, Vpad), jnp.float32).at[:, :vocab_size].set(
        0.02 * rnd((1, vocab_size)))

    params = {
        "vocab_size": vocab_size,
        "n_heads": n_heads,
        "tok_emb": rnd((vocab_size, H)),
        "pos_emb": rnd((sequence_length, H)),
        # per-block weights stacked on a leading n_blocks axis; MXU weights bf16
        "wqkv": rnd((n_blocks, H, 3 * H), fan_in=H).astype(jnp.bfloat16),
        "wo":   rnd((n_blocks, H, H), fan_in=H).astype(jnp.bfloat16),
        "bo":   0.02 * rnd((n_blocks, 1, H)),
        "g1":   jnp.ones((n_blocks, 1, H), jnp.float32),
        "b1":   jnp.zeros((n_blocks, 1, H), jnp.float32),
        "g2":   jnp.ones((n_blocks, 1, H), jnp.float32),
        "b2":   jnp.zeros((n_blocks, 1, H), jnp.float32),
        "we":   rnd((n_blocks, H, F), fan_in=H).astype(jnp.bfloat16),
        "be":   0.02 * rnd((n_blocks, 1, F)),
        "wc":   rnd((n_blocks, F, H), fan_in=F).astype(jnp.bfloat16),
        "bc":   0.02 * rnd((n_blocks, 1, H)),
        "g_f":  jnp.ones((1, H), jnp.float32),
        "b_f":  jnp.zeros((1, H), jnp.float32),
        "w_lm": w_lm.astype(jnp.bfloat16),
        "b_lm": b_lm,
    }
    return params


# ---------------------------------------------------------------------------
# pure-JAX f32 reference (spec math) for correctness sanity check
# ---------------------------------------------------------------------------
def reference_forward(tokens, params):
    B, T = tokens.shape
    V = params["vocab_size"]
    n_heads = params["n_heads"]
    H = params["tok_emb"].shape[1]
    hs = H // n_heads
    n_blocks = params["wqkv"].shape[0]

    x = params["tok_emb"][tokens] + params["pos_emb"][:T][None, :, :]
    causal = jnp.tril(jnp.ones((T, T), bool))[None]
    for b in range(n_blocks):
        wqkv = params["wqkv"][b].astype(jnp.float32)
        wo = params["wo"][b].astype(jnp.float32)
        xn = _layernorm(x, params["g1"][b], params["b1"][b])
        q = xn @ wqkv[:, :H]
        k = xn @ wqkv[:, H:2 * H]
        v = xn @ wqkv[:, 2 * H:]
        heads = []
        for h in range(n_heads):
            sl = slice(h * hs, (h + 1) * hs)
            att = jnp.einsum('bqd,bkd->bqk', q[..., sl], k[..., sl]) / math.sqrt(hs)
            att = jnp.where(causal, att, -jnp.inf)
            att = jax.nn.softmax(att, axis=-1)
            heads.append(att @ v[..., sl])
        mh = jnp.concatenate(heads, axis=-1) @ wo + params["bo"][b]
        x = x + mh
        xn2 = _layernorm(x, params["g2"][b], params["b2"][b])
        we = params["we"][b].astype(jnp.float32)
        wc = params["wc"][b].astype(jnp.float32)
        hid = jnp.maximum(xn2 @ we + params["be"][b], 0.0)
        x = x + hid @ wc + params["bc"][b]
    xn = _layernorm(x, params["g_f"], params["b_f"])
    w_lm = params["w_lm"].astype(jnp.float32)[:, :V]
    return xn @ w_lm + params["b_lm"][:, :V]


if __name__ == "__main__":
    VOCAB, HIDDEN, SEQ, N_HEADS, N_BLOCKS = 32, 32, 8, 4, 2
    B, T = 2, 8

    key = jax.random.PRNGKey(0)
    pkey, tkey = jax.random.split(key)
    params = make_params(pkey, VOCAB, HIDDEN, SEQ, N_HEADS, N_BLOCKS)
    tokens = jax.random.randint(tkey, (B, T), 0, VOCAB, dtype=jnp.int32)

    logits, loss = transformer_forward(tokens, params)
    logits = jax.block_until_ready(logits)

    ref = reference_forward(tokens, params)
    # bf16 MXU path + approx reciprocal => compare with a tolerance that
    # accommodates bf16 rounding while still catching structural errors.
    np.testing.assert_allclose(np.asarray(logits), np.asarray(ref),
                               rtol=3e-2, atol=3e-2)
    assert logits.shape == (B, T, VOCAB) and loss is None
    print("KERNEL_OK")
</pallas_src>

<mosaic_0001>
module attributes {stable_mosaic.version = 11 : i64} {
  func.func @gpt_kernel(%arg0: i32, %arg1: i32, %arg2: memref<8x32xf32, #tpu.memory_space<vmem>>, %arg3: memref<1x32x96xbf16, #tpu.memory_space<vmem>>, %arg4: memref<1x32x32xbf16, #tpu.memory_space<vmem>>, %arg5: memref<1x1x32xf32, #tpu.memory_space<vmem>>, %arg6: memref<1x1x32xf32, #tpu.memory_space<vmem>>, %arg7: memref<1x1x32xf32, #tpu.memory_space<vmem>>, %arg8: memref<1x1x32xf32, #tpu.memory_space<vmem>>, %arg9: memref<1x1x32xf32, #tpu.memory_space<vmem>>, %arg10: memref<1x32x128xbf16, #tpu.memory_space<vmem>>, %arg11: memref<1x1x128xf32, #tpu.memory_space<vmem>>, %arg12: memref<1x128x32xbf16, #tpu.memory_space<vmem>>, %arg13: memref<1x1x32xf32, #tpu.memory_space<vmem>>, %arg14: memref<1x32xf32, #tpu.memory_space<vmem>>, %arg15: memref<1x32xf32, #tpu.memory_space<vmem>>, %arg16: memref<32x128xbf16, #tpu.memory_space<vmem>>, %arg17: memref<1x128xf32, #tpu.memory_space<vmem>>, %arg18: memref<8x128xf32, #tpu.memory_space<vmem>>, %arg19: memref<8x32xf32, #tpu.memory_space<vmem>>) attributes {dimension_semantics = [#tpu.dimension_semantics<parallel>, #tpu.dimension_semantics<arbitrary>], iteration_bounds = array<i64: 2, 2>, scalar_prefetch = 0 : i64, scratch_operands = 1 : i64, tpu.core_type = #tpu.core_type<tc>, window_params = [{transform_indices = @transform_0, window_bounds = array<i64: 8, 32>}, {transform_indices = @transform_1, window_bounds = array<i64: 1, 32, 96>}, {transform_indices = @transform_2, window_bounds = array<i64: 1, 32, 32>}, {transform_indices = @transform_3, window_bounds = array<i64: 1, 1, 32>}, {transform_indices = @transform_4, window_bounds = array<i64: 1, 1, 32>}, {transform_indices = @transform_5, window_bounds = array<i64: 1, 1, 32>}, {transform_indices = @transform_6, window_bounds = array<i64: 1, 1, 32>}, {transform_indices = @transform_7, window_bounds = array<i64: 1, 1, 32>}, {transform_indices = @transform_8, window_bounds = array<i64: 1, 32, 128>}, {transform_indices = @transform_9, window_bounds = array<i64: 1, 1, 128>}, {transform_indices = @transform_10, window_bounds = array<i64: 1, 128, 32>}, {transform_indices = @transform_11, window_bounds = array<i64: 1, 1, 32>}, {pipeline_mode = #tpu.pipeline_mode<synchronous>, transform_indices = @transform_12, window_bounds = array<i64: 1, 32>}, {pipeline_mode = #tpu.pipeline_mode<synchronous>, transform_indices = @transform_13, window_bounds = array<i64: 1, 32>}, {pipeline_mode = #tpu.pipeline_mode<synchronous>, transform_indices = @transform_14, window_bounds = array<i64: 32, 128>}, {pipeline_mode = #tpu.pipeline_mode<synchronous>, transform_indices = @transform_15, window_bounds = array<i64: 1, 128>}, {transform_indices = @transform_16, window_bounds = array<i64: 8, 128>}]} {
    %c0_i32 = arith.constant 0 : i32
    %0 = arith.cmpi eq, %arg1, %c0_i32 : i32
    %1 = arith.extui %0 : i1 to i32
    %c0_i32_0 = arith.constant 0 : i32
    %2 = arith.cmpi ne, %1, %c0_i32_0 : i32
    scf.if %2 {
      %c0_72 = arith.constant 0 : index
      %c0_73 = arith.constant 0 : index
      %180 = vector.load %arg2[%c0_72, %c0_73] : memref<8x32xf32, #tpu.memory_space<vmem>>, vector<8x32xf32>
      %c0_74 = arith.constant 0 : index
      %c0_75 = arith.constant 0 : index
      %181 = vector.load %arg19[%c0_74, %c0_75] : memref<8x32xf32, #tpu.memory_space<vmem>>, vector<8x32xf32>
      tpu.vector_store %arg19[%c0_74, %c0_75], %180 {strides = array<i32>} : memref<8x32xf32, #tpu.memory_space<vmem>>, vector<8x32xf32>,
    } else {
    }
    %c0 = arith.constant 0 : index
    %c0_1 = arith.constant 0 : index
    %3 = vector.load %arg19[%c0, %c0_1] : memref<8x32xf32, #tpu.memory_space<vmem>>, vector<8x32xf32>
    %4 = tpu.iota {dimensions = array<i32: 0>} : vector<8x8xi32>
    %5 = tpu.iota {dimensions = array<i32: 1>} : vector<8x8xi32>
    %6 = arith.cmpi sge, %4, %5 : vector<8x8xi32>
    %7 = vector.shape_cast %6 : vector<8x8xi1> to vector<1x8x8xi1>
    %c0_2 = arith.constant 0 : index
    %c0_3 = arith.constant 0 : index
    %c0_4 = arith.constant 0 : index
    %8 = vector.load %arg6[%c0_2, %c0_3, %c0_4] : memref<1x1x32xf32, #tpu.memory_space<vmem>>, vector<1x1x32xf32>
    %9 = vector.shape_cast %8 : vector<1x1x32xf32> to vector<1x32xf32>
    %c0_5 = arith.constant 0 : index
    %c0_6 = arith.constant 0 : index
    %c0_7 = arith.constant 0 : index
    %10 = vector.load %arg7[%c0_5, %c0_6, %c0_7] : memref<1x1x32xf32, #tpu.memory_space<vmem>>, vector<1x1x32xf32>
    %11 = vector.shape_cast %10 : vector<1x1x32xf32> to vector<1x32xf32>
    %cst = arith.constant dense<0.000000e+00> : vector<8xf32>
    %12 = vector.multi_reduction <add>, %3, %cst [1] : vector<8x32xf32> to vector<8xf32>
    %13 = vector.shape_cast %12 : vector<8xf32> to vector<8x1xf32>
    %cst_8 = arith.constant 3.200000e+01 : f32
    %14 = vector.broadcast %cst_8 : f32 to vector<8x1xf32>
    %15 = arith.divf %13, %14 : vector<8x1xf32>
    %16 = vector.broadcast %15 : vector<8x1xf32> to vector<8x32xf32>
    %17 = arith.subf %3, %16 : vector<8x32xf32>
    %18 = arith.mulf %17, %17 : vector<8x32xf32>
    %cst_9 = arith.constant dense<0.000000e+00> : vector<8xf32>
    %19 = vector.multi_reduction <add>, %18, %cst_9 [1] : vector<8x32xf32> to vector<8xf32>
    %20 = vector.shape_cast %19 : vector<8xf32> to vector<8x1xf32>
    %cst_10 = arith.constant 3.200000e+01 : f32
    %21 = vector.broadcast %cst_10 : f32 to vector<8x1xf32>
    %22 = arith.divf %20, %21 : vector<8x1xf32>
    %23 = vector.broadcast %15 : vector<8x1xf32> to vector<8x32xf32>
    %24 = arith.subf %3, %23 : vector<8x32xf32>
    %cst_11 = arith.constant 9.99999974E-6 : f32
    %25 = vector.broadcast %cst_11 : f32 to vector<8x1xf32>
    %26 = arith.addf %22, %25 : vector<8x1xf32>
    %27 = math.rsqrt %26 : vector<8x1xf32>
    %28 = vector.broadcast %27 : vector<8x1xf32> to vector<8x32xf32>
    %29 = arith.mulf %24, %28 : vector<8x32xf32>
    %30 = vector.broadcast %9 : vector<1x32xf32> to vector<8x32xf32>
    %31 = arith.mulf %29, %30 : vector<8x32xf32>
    %32 = vector.broadcast %11 : vector<1x32xf32> to vector<8x32xf32>
    %33 = arith.addf %31, %32 : vector<8x32xf32>
    %34 = arith.truncf %33 : vector<8x32xf32> to vector<8x32xbf16>
    %c0_12 = arith.constant 0 : index
    %c0_13 = arith.constant 0 : index
    %c0_14 = arith.constant 0 : index
    %35 = vector.load %arg3[%c0_12, %c0_13, %c0_14] : memref<1x32x96xbf16, #tpu.memory_space<vmem>>, vector<1x32x96xbf16>
    %36 = vector.shape_cast %35 : vector<1x32x96xbf16> to vector<32x96xbf16>
    %cst_15 = arith.constant dense<0.000000e+00> : vector<8x96xf32>
    %37 = tpu.matmul %34, %36, %cst_15 {dimension_numbers = #tpu.dot_dimension_numbers<[1], [0], [0], [1], [0, 0, 1, 1], [], []>} : vector<8x32xbf16>, vector<32x96xbf16>, vector<8x96xf32> -> vector<8x96xf32>
    %38 = arith.truncf %37 : vector<8x96xf32> to vector<8x96xbf16>
    %39 = vector.extract_strided_slice %38 {offsets = [0, 0], sizes = [8, 32], strides = [1, 1]} : vector<8x96xbf16> to vector<8x32xbf16>
    %40 = vector.shape_cast %39 : vector<8x32xbf16> to vector<1x8x32xbf16>
    %41 = vector.extract_strided_slice %38 {offsets = [0, 32], sizes = [8, 32], strides = [1, 1]} : vector<8x96xbf16> to vector<8x32xbf16>
    %42 = vector.shape_cast %41 : vector<8x32xbf16> to vector<1x8x32xbf16>
    %43 = vector.extract_strided_slice %38 {offsets = [0, 64], sizes = [8, 32], strides = [1, 1]} : vector<8x96xbf16> to vector<8x32xbf16>
    %44 = vector.shape_cast %43 : vector<8x32xbf16> to vector<1x8x32xbf16>
    %45 = vector.extract_strided_slice %40 {offsets = [0, 0, 0], sizes = [1, 8, 8], strides = [1, 1, 1]} : vector<1x8x32xbf16> to vector<1x8x8xbf16>
    %46 = vector.extract_strided_slice %42 {offsets = [0, 0, 0], sizes = [1, 8, 8], strides = [1, 1, 1]} : vector<1x8x32xbf16> to vector<1x8x8xbf16>
    "tpu.trace_start"() <{level = 10 : i32, message = "bqd,bkd->bqk"}> : () -> ()
    %cst_16 = arith.constant dense<0.000000e+00> : vector<1x8x8xf32>
    %47 = tpu.matmul %45, %46, %cst_16 {dimension_numbers = #tpu.dot_dimension_numbers<[2], [2], [1], [1], [0, 0, 0, 1, 1, 1], [0], [0]>} : vector<1x8x8xbf16>, vector<1x8x8xbf16>, vector<1x8x8xf32> -> vector<1x8x8xf32>
    %cst_17 = arith.constant -1.000000e+30 : f32
    "tpu.trace_stop"() : () -> ()
    %48 = vector.broadcast %cst_17 : f32 to vector<1x8x8xf32>
    %49 = arith.select %7, %47, %48 : vector<1x8x8xi1>, vector<1x8x8xf32>
    %cst_18 = arith.constant dense<0xFF800000> : vector<1x8xf32>
    %50 = vector.multi_reduction <maximumf>, %49, %cst_18 [2] : vector<1x8x8xf32> to vector<1x8xf32>
    %51 = vector.shape_cast %50 : vector<1x8xf32> to vector<1x8x1xf32>
    %52 = vector.broadcast %51 : vector<1x8x1xf32> to vector<1x8x8xf32>
    %53 = arith.subf %49, %52 : vector<1x8x8xf32>
    %54 = math.exp %53 : vector<1x8x8xf32>
    %cst_19 = arith.constant dense<0.000000e+00> : vector<1x8xf32>
    %55 = vector.multi_reduction <add>, %54, %cst_19 [2] : vector<1x8x8xf32> to vector<1x8xf32>
    %56 = vector.shape_cast %55 : vector<1x8xf32> to vector<1x8x1xf32>
    %57 = tpu.reciprocal %56 {approx = true} : vector<1x8x1xf32> -> vector<1x8x1xf32>
    %58 = vector.broadcast %57 : vector<1x8x1xf32> to vector<1x8x8xf32>
    %59 = arith.mulf %54, %58 : vector<1x8x8xf32>
    %60 = arith.truncf %59 : vector<1x8x8xf32> to vector<1x8x8xbf16>
    %61 = vector.extract_strided_slice %44 {offsets = [0, 0, 0], sizes = [1, 8, 8], strides = [1, 1, 1]} : vector<1x8x32xbf16> to vector<1x8x8xbf16>
    "tpu.trace_start"() <{level = 10 : i32, message = "bqk,bkd->bqd"}> : () -> ()
    %cst_20 = arith.constant dense<0.000000e+00> : vector<1x8x8xf32>
    %62 = tpu.matmul %60, %61, %cst_20 {dimension_numbers = #tpu.dot_dimension_numbers<[2], [1], [1], [2], [0, 0, 0, 1, 1, 2], [0], [0]>} : vector<1x8x8xbf16>, vector<1x8x8xbf16>, vector<1x8x8xf32> -> vector<1x8x8xf32>
    "tpu.trace_stop"() : () -> ()
    %63 = vector.shape_cast %62 : vector<1x8x8xf32> to vector<8x8xf32>
    %64 = vector.extract_strided_slice %40 {offsets = [0, 0, 8], sizes = [1, 8, 8], strides = [1, 1, 1]} : vector<1x8x32xbf16> to vector<1x8x8xbf16>
    %65 = vector.extract_strided_slice %42 {offsets = [0, 0, 8], sizes = [1, 8, 8], strides = [1, 1, 1]} : vector<1x8x32xbf16> to vector<1x8x8xbf16>
    "tpu.trace_start"() <{level = 10 : i32, message = "bqd,bkd->bqk"}> : () -> ()
    %cst_21 = arith.constant dense<0.000000e+00> : vector<1x8x8xf32>
    %66 = tpu.matmul %64, %65, %cst_21 {dimension_numbers = #tpu.dot_dimension_numbers<[2], [2], [1], [1], [0, 0, 0, 1, 1, 1], [0], [0]>} : vector<1x8x8xbf16>, vector<1x8x8xbf16>, vector<1x8x8xf32> -> vector<1x8x8xf32>
    %cst_22 = arith.constant -1.000000e+30 : f32
    "tpu.trace_stop"() : () -> ()
    %67 = vector.broadcast %cst_22 : f32 to vector<1x8x8xf32>
    %68 = arith.select %7, %66, %67 : vector<1x8x8xi1>, vector<1x8x8xf32>
    %cst_23 = arith.constant dense<0xFF800000> : vector<1x8xf32>
    %69 = vector.multi_reduction <maximumf>, %68, %cst_23 [2] : vector<1x8x8xf32> to vector<1x8xf32>
    %70 = vector.shape_cast %69 : vector<1x8xf32> to vector<1x8x1xf32>
    %71 = vector.broadcast %70 : vector<1x8x1xf32> to vector<1x8x8xf32>
    %72 = arith.subf %68, %71 : vector<1x8x8xf32>
    %73 = math.exp %72 : vector<1x8x8xf32>
    %cst_24 = arith.constant dense<0.000000e+00> : vector<1x8xf32>
    %74 = vector.multi_reduction <add>, %73, %cst_24 [2] : vector<1x8x8xf32> to vector<1x8xf32>
    %75 = vector.shape_cast %74 : vector<1x8xf32> to vector<1x8x1xf32>
    %76 = tpu.reciprocal %75 {approx = true} : vector<1x8x1xf32> -> vector<1x8x1xf32>
    %77 = vector.broadcast %76 : vector<1x8x1xf32> to vector<1x8x8xf32>
    %78 = arith.mulf %73, %77 : vector<1x8x8xf32>
    %79 = arith.truncf %78 : vector<1x8x8xf32> to vector<1x8x8xbf16>
    %80 = vector.extract_strided_slice %44 {offsets = [0, 0, 8], sizes = [1, 8, 8], strides = [1, 1, 1]} : vector<1x8x32xbf16> to vector<1x8x8xbf16>
    "tpu.trace_start"() <{level = 10 : i32, message = "bqk,bkd->bqd"}> : () -> ()
    %cst_25 = arith.constant dense<0.000000e+00> : vector<1x8x8xf32>
    %81 = tpu.matmul %79, %80, %cst_25 {dimension_numbers = #tpu.dot_dimension_numbers<[2], [1], [1], [2], [0, 0, 0, 1, 1, 2], [0], [0]>} : vector<1x8x8xbf16>, vector<1x8x8xbf16>, vector<1x8x8xf32> -> vector<1x8x8xf32>
    "tpu.trace_stop"() : () -> ()
    %82 = vector.shape_cast %81 : vector<1x8x8xf32> to vector<8x8xf32>
    %83 = vector.extract_strided_slice %40 {offsets = [0, 0, 16], sizes = [1, 8, 8], strides = [1, 1, 1]} : vector<1x8x32xbf16> to vector<1x8x8xbf16>
    %84 = vector.extract_strided_slice %42 {offsets = [0, 0, 16], sizes = [1, 8, 8], strides = [1, 1, 1]} : vector<1x8x32xbf16> to vector<1x8x8xbf16>
    "tpu.trace_start"() <{level = 10 : i32, message = "bqd,bkd->bqk"}> : () -> ()
    %cst_26 = arith.constant dense<0.000000e+00> : vector<1x8x8xf32>
    %85 = tpu.matmul %83, %84, %cst_26 {dimension_numbers = #tpu.dot_dimension_numbers<[2], [2], [1], [1], [0, 0, 0, 1, 1, 1], [0], [0]>} : vector<1x8x8xbf16>, vector<1x8x8xbf16>, vector<1x8x8xf32> -> vector<1x8x8xf32>
    %cst_27 = arith.constant -1.000000e+30 : f32
    "tpu.trace_stop"() : () -> ()
    %86 = vector.broadcast %cst_27 : f32 to vector<1x8x8xf32>
    %87 = arith.select %7, %85, %86 : vector<1x8x8xi1>, vector<1x8x8xf32>
    %cst_28 = arith.constant dense<0xFF800000> : vector<1x8xf32>
    %88 = vector.multi_reduction <maximumf>, %87, %cst_28 [2] : vector<1x8x8xf32> to vector<1x8xf32>
    %89 = vector.shape_cast %88 : vector<1x8xf32> to vector<1x8x1xf32>
    %90 = vector.broadcast %89 : vector<1x8x1xf32> to vector<1x8x8xf32>
    %91 = arith.subf %87, %90 : vector<1x8x8xf32>
    %92 = math.exp %91 : vector<1x8x8xf32>
    %cst_29 = arith.constant dense<0.000000e+00> : vector<1x8xf32>
    %93 = vector.multi_reduction <add>, %92, %cst_29 [2] : vector<1x8x8xf32> to vector<1x8xf32>
    %94 = vector.shape_cast %93 : vector<1x8xf32> to vector<1x8x1xf32>
    %95 = tpu.reciprocal %94 {approx = true} : vector<1x8x1xf32> -> vector<1x8x1xf32>
    %96 = vector.broadcast %95 : vector<1x8x1xf32> to vector<1x8x8xf32>
    %97 = arith.mulf %92, %96 : vector<1x8x8xf32>
    %98 = arith.truncf %97 : vector<1x8x8xf32> to vector<1x8x8xbf16>
    %99 = vector.extract_strided_slice %44 {offsets = [0, 0, 16], sizes = [1, 8, 8], strides = [1, 1, 1]} : vector<1x8x32xbf16> to vector<1x8x8xbf16>
    "tpu.trace_start"() <{level = 10 : i32, message = "bqk,bkd->bqd"}> : () -> ()
    %cst_30 = arith.constant dense<0.000000e+00> : vector<1x8x8xf32>
    %100 = tpu.matmul %98, %99, %cst_30 {dimension_numbers = #tpu.dot_dimension_numbers<[2], [1], [1], [2], [0, 0, 0, 1, 1, 2], [0], [0]>} : vector<1x8x8xbf16>, vector<1x8x8xbf16>, vector<1x8x8xf32> -> vector<1x8x8xf32>
    "tpu.trace_stop"() : () -> ()
    %101 = vector.shape_cast %100 : vector<1x8x8xf32> to vector<8x8xf32>
    %102 = vector.extract_strided_slice %40 {offsets = [0, 0, 24], sizes = [1, 8, 8], strides = [1, 1, 1]} : vector<1x8x32xbf16> to vector<1x8x8xbf16>
    %103 = vector.extract_strided_slice %42 {offsets = [0, 0, 24], sizes = [1, 8, 8], strides = [1, 1, 1]} : vector<1x8x32xbf16> to vector<1x8x8xbf16>
    "tpu.trace_start"() <{level = 10 : i32, message = "bqd,bkd->bqk"}> : () -> ()
    %cst_31 = arith.constant dense<0.000000e+00> : vector<1x8x8xf32>
    %104 = tpu.matmul %102, %103, %cst_31 {dimension_numbers = #tpu.dot_dimension_numbers<[2], [2], [1], [1], [0, 0, 0, 1, 1, 1], [0], [0]>} : vector<1x8x8xbf16>, vector<1x8x8xbf16>, vector<1x8x8xf32> -> vector<1x8x8xf32>
    %cst_32 = arith.constant -1.000000e+30 : f32
    "tpu.trace_stop"() : () -> ()
    %105 = vector.broadcast %cst_32 : f32 to vector<1x8x8xf32>
    %106 = arith.select %7, %104, %105 : vector<1x8x8xi1>, vector<1x8x8xf32>
    %cst_33 = arith.constant dense<0xFF800000> : vector<1x8xf32>
    %107 = vector.multi_reduction <maximumf>, %106, %cst_33 [2] : vector<1x8x8xf32> to vector<1x8xf32>
    %108 = vector.shape_cast %107 : vector<1x8xf32> to vector<1x8x1xf32>
    %109 = vector.broadcast %108 : vector<1x8x1xf32> to vector<1x8x8xf32>
    %110 = arith.subf %106, %109 : vector<1x8x8xf32>
    %111 = math.exp %110 : vector<1x8x8xf32>
    %cst_34 = arith.constant dense<0.000000e+00> : vector<1x8xf32>
    %112 = vector.multi_reduction <add>, %111, %cst_34 [2] : vector<1x8x8xf32> to vector<1x8xf32>
    %113 = vector.shape_cast %112 : vector<1x8xf32> to vector<1x8x1xf32>
    %114 = tpu.reciprocal %113 {approx = true} : vector<1x8x1xf32> -> vector<1x8x1xf32>
    %115 = vector.broadcast %114 : vector<1x8x1xf32> to vector<1x8x8xf32>
    %116 = arith.mulf %111, %115 : vector<1x8x8xf32>
    %117 = arith.truncf %116 : vector<1x8x8xf32> to vector<1x8x8xbf16>
    %118 = vector.extract_strided_slice %44 {offsets = [0, 0, 24], sizes = [1, 8, 8], strides = [1, 1, 1]} : vector<1x8x32xbf16> to vector<1x8x8xbf16>
    "tpu.trace_start"() <{level = 10 : i32, message = "bqk,bkd->bqd"}> : () -> ()
    %cst_35 = arith.constant dense<0.000000e+00> : vector<1x8x8xf32>
    %119 = tpu.matmul %117, %118, %cst_35 {dimension_numbers = #tpu.dot_dimension_numbers<[2], [1], [1], [2], [0, 0, 0, 1, 1, 2], [0], [0]>} : vector<1x8x8xbf16>, vector<1x8x8xbf16>, vector<1x8x8xf32> -> vector<1x8x8xf32>
    "tpu.trace_stop"() : () -> ()
    %120 = vector.shape_cast %119 : vector<1x8x8xf32> to vector<8x8xf32>
    %121 = tpu.concatenate %63, %82, %101, %120 in 1 : vector<8x8xf32>, vector<8x8xf32>, vector<8x8xf32>, vector<8x8xf32> -> vector<8x32xf32>
    %122 = arith.truncf %121 : vector<8x32xf32> to vector<8x32xbf16>
    %c0_36 = arith.constant 0 : index
    %c0_37 = arith.constant 0 : index
    %c0_38 = arith.constant 0 : index
    %123 = vector.load %arg4[%c0_36, %c0_37, %c0_38] : memref<1x32x32xbf16, #tpu.memory_space<vmem>>, vector<1x32x32xbf16>
    %124 = vector.shape_cast %123 : vector<1x32x32xbf16> to vector<32x32xbf16>
    %cst_39 = arith.constant dense<0.000000e+00> : vector<8x32xf32>
    %125 = tpu.matmul %122, %124, %cst_39 {dimension_numbers = #tpu.dot_dimension_numbers<[1], [0], [0], [1], [0, 0, 1, 1], [], []>} : vector<8x32xbf16>, vector<32x32xbf16>, vector<8x32xf32> -> vector<8x32xf32>
    %c0_40 = arith.constant 0 : index
    %c0_41 = arith.constant 0 : index
    %c0_42 = arith.constant 0 : index
    %126 = vector.load %arg5[%c0_40, %c0_41, %c0_42] : memref<1x1x32xf32, #tpu.memory_space<vmem>>, vector<1x1x32xf32>
    %127 = vector.shape_cast %126 : vector<1x1x32xf32> to vector<1x32xf32>
    %128 = vector.broadcast %127 : vector<1x32xf32> to vector<8x32xf32>
    %129 = arith.addf %125, %128 : vector<8x32xf32>
    %130 = arith.addf %3, %129 : vector<8x32xf32>
    %c0_43 = arith.constant 0 : index
    %c0_44 = arith.constant 0 : index
    %c0_45 = arith.constant 0 : index
    %131 = vector.load %arg8[%c0_43, %c0_44, %c0_45] : memref<1x1x32xf32, #tpu.memory_space<vmem>>, vector<1x1x32xf32>
    %132 = vector.shape_cast %131 : vector<1x1x32xf32> to vector<1x32xf32>
    %c0_46 = arith.constant 0 : index
    %c0_47 = arith.constant 0 : index
    %c0_48 = arith.constant 0 : index
    %133 = vector.load %arg9[%c0_46, %c0_47, %c0_48] : memref<1x1x32xf32, #tpu.memory_space<vmem>>, vector<1x1x32xf32>
    %134 = vector.shape_cast %133 : vector<1x1x32xf32> to vector<1x32xf32>
    %cst_49 = arith.constant dense<0.000000e+00> : vector<8xf32>
    %135 = vector.multi_reduction <add>, %130, %cst_49 [1] : vector<8x32xf32> to vector<8xf32>
    %136 = vector.shape_cast %135 : vector<8xf32> to vector<8x1xf32>
    %cst_50 = arith.constant 3.200000e+01 : f32
    %137 = vector.broadcast %cst_50 : f32 to vector<8x1xf32>
    %138 = arith.divf %136, %137 : vector<8x1xf32>
    %139 = vector.broadcast %138 : vector<8x1xf32> to vector<8x32xf32>
    %140 = arith.subf %130, %139 : vector<8x32xf32>
    %141 = arith.mulf %140, %140 : vector<8x32xf32>
    %cst_51 = arith.constant dense<0.000000e+00> : vector<8xf32>
    %142 = vector.multi_reduction <add>, %141, %cst_51 [1] : vector<8x32xf32> to vector<8xf32>
    %143 = vector.shape_cast %142 : vector<8xf32> to vector<8x1xf32>
    %cst_52 = arith.constant 3.200000e+01 : f32
    %144 = vector.broadcast %cst_52 : f32 to vector<8x1xf32>
    %145 = arith.divf %143, %144 : vector<8x1xf32>
    %146 = vector.broadcast %138 : vector<8x1xf32> to vector<8x32xf32>
    %147 = arith.subf %130, %146 : vector<8x32xf32>
    %cst_53 = arith.constant 9.99999974E-6 : f32
    %148 = vector.broadcast %cst_53 : f32 to vector<8x1xf32>
    %149 = arith.addf %145, %148 : vector<8x1xf32>
    %150 = math.rsqrt %149 : vector<8x1xf32>
    %151 = vector.broadcast %150 : vector<8x1xf32> to vector<8x32xf32>
    %152 = arith.mulf %147, %151 : vector<8x32xf32>
    %153 = vector.broadcast %132 : vector<1x32xf32> to vector<8x32xf32>
    %154 = arith.mulf %152, %153 : vector<8x32xf32>
    %155 = vector.broadcast %134 : vector<1x32xf32> to vector<8x32xf32>
    %156 = arith.addf %154, %155 : vector<8x32xf32>
    %157 = arith.truncf %156 : vector<8x32xf32> to vector<8x32xbf16>
    %c0_54 = arith.constant 0 : index
    %c0_55 = arith.constant 0 : index
    %c0_56 = arith.constant 0 : index
    %158 = vector.load %arg10[%c0_54, %c0_55, %c0_56] : memref<1x32x128xbf16, #tpu.memory_space<vmem>>, vector<1x32x128xbf16>
    %159 = vector.shape_cast %158 : vector<1x32x128xbf16> to vector<32x128xbf16>
    %cst_57 = arith.constant dense<0.000000e+00> : vector<8x128xf32>
    %160 = tpu.matmul %157, %159, %cst_57 {dimension_numbers = #tpu.dot_dimension_numbers<[1], [0], [0], [1], [0, 0, 1, 1], [], []>} : vector<8x32xbf16>, vector<32x128xbf16>, vector<8x128xf32> -> vector<8x128xf32>
    %c0_58 = arith.constant 0 : index
    %c0_59 = arith.constant 0 : index
    %c0_60 = arith.constant 0 : index
    %161 = vector.load %arg11[%c0_58, %c0_59, %c0_60] : memref<1x1x128xf32, #tpu.memory_space<vmem>>, vector<1x1x128xf32>
    %162 = vector.shape_cast %161 : vector<1x1x128xf32> to vector<1x128xf32>
    %163 = vector.broadcast %162 : vector<1x128xf32> to vector<8x128xf32>
    %164 = arith.addf %160, %163 : vector<8x128xf32>
    %cst_61 = arith.constant 0.000000e+00 : f32
    %165 = vector.broadcast %cst_61 : f32 to vector<8x128xf32>
    %166 = arith.maximumf %164, %165 : vector<8x128xf32>
    %167 = arith.truncf %166 : vector<8x128xf32> to vector<8x128xbf16>
    %c0_62 = arith.constant 0 : index
    %c0_63 = arith.constant 0 : index
    %c0_64 = arith.constant 0 : index
    %168 = vector.load %arg12[%c0_62, %c0_63, %c0_64] : memref<1x128x32xbf16, #tpu.memory_space<vmem>>, vector<1x128x32xbf16>
    %169 = vector.shape_cast %168 : vector<1x128x32xbf16> to vector<128x32xbf16>
    %cst_65 = arith.constant dense<0.000000e+00> : vector<8x32xf32>
    %170 = tpu.matmul %167, %169, %cst_65 {dimension_numbers = #tpu.dot_dimension_numbers<[1], [0], [0], [1], [0, 0, 1, 1], [], []>} : vector<8x128xbf16>, vector<128x32xbf16>, vector<8x32xf32> -> vector<8x32xf32>
    %c0_66 = arith.constant 0 : index
    %c0_67 = arith.constant 0 : index
    %c0_68 = arith.constant 0 : index
    %171 = vector.load %arg13[%c0_66, %c0_67, %c0_68] : memref<1x1x32xf32, #tpu.memory_space<vmem>>, vector<1x1x32xf32>
    %172 = vector.shape_cast %171 : vector<1x1x32xf32> to vector<1x32xf32>
    %173 = vector.broadcast %172 : vector<1x32xf32> to vector<8x32xf32>
    %174 = arith.addf %170, %173 : vector<8x32xf32>
    %175 = arith.addf %130, %174 : vector<8x32xf32>
    %c0_69 = arith.constant 0 : index
    %c0_70 = arith.constant 0 : index
    %176 = vector.load %arg19[%c0_69, %c0_70] : memref<8x32xf32, #tpu.memory_space<vmem>>, vector<8x32xf32>
    tpu.vector_store %arg19[%c0_69, %c0_70], %175 {strides = array<i32>} : memref<8x32xf32, #tpu.memory_space<vmem>>, vector<8x32xf32>,
    %c1_i32 = arith.constant 1 : i32
    %177 = arith.cmpi eq, %arg1, %c1_i32 : i32
    %178 = arith.extui %177 : i1 to i32
    %c0_i32_71 = arith.constant 0 : i32
    %179 = arith.cmpi ne, %178, %c0_i32_71 : i32
    scf.if %179 {
      %c0_72 = arith.constant 0 : index
      %c0_73 = arith.constant 0 : index
      %180 = vector.load %arg14[%c0_72, %c0_73] : memref<1x32xf32, #tpu.memory_space<vmem>>, vector<1x32xf32>
      %c0_74 = arith.constant 0 : index
      %c0_75 = arith.constant 0 : index
      %181 = vector.load %arg15[%c0_74, %c0_75] : memref<1x32xf32, #tpu.memory_space<vmem>>, vector<1x32xf32>
      %cst_76 = arith.constant dense<0.000000e+00> : vector<8xf32>
      %182 = vector.multi_reduction <add>, %175, %cst_76 [1] : vector<8x32xf32> to vector<8xf32>
      %183 = vector.shape_cast %182 : vector<8xf32> to vector<8x1xf32>
      %cst_77 = arith.constant 3.200000e+01 : f32
      %184 = vector.broadcast %cst_77 : f32 to vector<8x1xf32>
      %185 = arith.divf %183, %184 : vector<8x1xf32>
      %186 = vector.broadcast %185 : vector<8x1xf32> to vector<8x32xf32>
      %187 = arith.subf %175, %186 : vector<8x32xf32>
      %188 = arith.mulf %187, %187 : vector<8x32xf32>
      %cst_78 = arith.constant dense<0.000000e+00> : vector<8xf32>
      %189 = vector.multi_reduction <add>, %188, %cst_78 [1] : vector<8x32xf32> to vector<8xf32>
      %190 = vector.shape_cast %189 : vector<8xf32> to vector<8x1xf32>
      %cst_79 = arith.constant 3.200000e+01 : f32
      %191 = vector.broadcast %cst_79 : f32 to vector<8x1xf32>
      %192 = arith.divf %190, %191 : vector<8x1xf32>
      %193 = vector.broadcast %185 : vector<8x1xf32> to vector<8x32xf32>
      %194 = arith.subf %175, %193 : vector<8x32xf32>
      %cst_80 = arith.constant 9.99999974E-6 : f32
      %195 = vector.broadcast %cst_80 : f32 to vector<8x1xf32>
      %196 = arith.addf %192, %195 : vector<8x1xf32>
      %197 = math.rsqrt %196 : vector<8x1xf32>
      %198 = vector.broadcast %197 : vector<8x1xf32> to vector<8x32xf32>
      %199 = arith.mulf %194, %198 : vector<8x32xf32>
      %200 = vector.broadcast %180 : vector<1x32xf32> to vector<8x32xf32>
      %201 = arith.mulf %199, %200 : vector<8x32xf32>
      %202 = vector.broadcast %181 : vector<1x32xf32> to vector<8x32xf32>
      %203 = arith.addf %201, %202 : vector<8x32xf32>
      %204 = arith.truncf %203 : vector<8x32xf32> to vector<8x32xbf16>
      %c0_81 = arith.constant 0 : index
      %c0_82 = arith.constant 0 : index
      %205 = vector.load %arg16[%c0_81, %c0_82] : memref<32x128xbf16, #tpu.memory_space<vmem>>, vector<32x128xbf16>
      %cst_83 = arith.constant dense<0.000000e+00> : vector<8x128xf32>
      %206 = tpu.matmul %204, %205, %cst_83 {dimension_numbers = #tpu.dot_dimension_numbers<[1], [0], [0], [1], [0, 0, 1, 1], [], []>} : vector<8x32xbf16>, vector<32x128xbf16>, vector<8x128xf32> -> vector<8x128xf32>
      %c0_84 = arith.constant 0 : index
      %c0_85 = arith.constant 0 : index
      %207 = vector.load %arg17[%c0_84, %c0_85] : memref<1x128xf32, #tpu.memory_space<vmem>>, vector<1x128xf32>
      %208 = vector.broadcast %207 : vector<1x128xf32> to vector<8x128xf32>
      %209 = arith.addf %206, %208 : vector<8x128xf32>
      %c0_86 = arith.constant 0 : index
      %c0_87 = arith.constant 0 : index
      %210 = vector.load %arg18[%c0_86, %c0_87] : memref<8x128xf32, #tpu.memory_space<vmem>>, vector<8x128xf32>
      tpu.vector_store %arg18[%c0_86, %c0_87], %209 {strides = array<i32>} : memref<8x128xf32, #tpu.memory_space<vmem>>, vector<8x128xf32>,
    } else {
    }
    return
  }
  func.func @transform_0(%arg0: i32, %arg1: i32) -> (i32, i32) {
    %c0_i32 = arith.constant 0 : i32
    %c0_i32_0 = arith.constant 0 : i32
    return %arg0, %c0_i32 : i32, i32
  }
  func.func @transform_1(%arg0: i32, %arg1: i32) -> (i32, i32, i32) {
    %c0_i32 = arith.constant 0 : i32
    %c0_i32_0 = arith.constant 0 : i32
    %c0_i32_1 = arith.constant 0 : i32
    return %arg1, %c0_i32, %c0_i32_0 : i32, i32, i32
  }
  func.func @transform_2(%arg0: i32, %arg1: i32) -> (i32, i32, i32) {
    %c0_i32 = arith.constant 0 : i32
    %c0_i32_0 = arith.constant 0 : i32
    %c0_i32_1 = arith.constant 0 : i32
    return %arg1, %c0_i32, %c0_i32_0 : i32, i32, i32
  }
  func.func @transform_3(%arg0: i32, %arg1: i32) -> (i32, i32, i32) {
    %c0_i32 = arith.constant 0 : i32
    %c0_i32_0 = arith.constant 0 : i32
    %c0_i32_1 = arith.constant 0 : i32
    return %arg1, %c0_i32, %c0_i32_0 : i32, i32, i32
  }
  func.func @transform_4(%arg0: i32, %arg1: i32) -> (i32, i32, i32) {
    %c0_i32 = arith.constant 0 : i32
    %c0_i32_0 = arith.constant 0 : i32
    %c0_i32_1 = arith.constant 0 : i32
    return %arg1, %c0_i32, %c0_i32_0 : i32, i32, i32
  }
  func.func @transform_5(%arg0: i32, %arg1: i32) -> (i32, i32, i32) {
    %c0_i32 = arith.constant 0 : i32
    %c0_i32_0 = arith.constant 0 : i32
    %c0_i32_1 = arith.constant 0 : i32
    return %arg1, %c0_i32, %c0_i32_0 : i32, i32, i32
  }
  func.func @transform_6(%arg0: i32, %arg1: i32) -> (i32, i32, i32) {
    %c0_i32 = arith.constant 0 : i32
    %c0_i32_0 = arith.constant 0 : i32
    %c0_i32_1 = arith.constant 0 : i32
    return %arg1, %c0_i32, %c0_i32_0 : i32, i32, i32
  }
  func.func @transform_7(%arg0: i32, %arg1: i32) -> (i32, i32, i32) {
    %c0_i32 = arith.constant 0 : i32
    %c0_i32_0 = arith.constant 0 : i32
    %c0_i32_1 = arith.constant 0 : i32
    return %arg1, %c0_i32, %c0_i32_0 : i32, i32, i32
  }
  func.func @transform_8(%arg0: i32, %arg1: i32) -> (i32, i32, i32) {
    %c0_i32 = arith.constant 0 : i32
    %c0_i32_0 = arith.constant 0 : i32
    %c0_i32_1 = arith.constant 0 : i32
    return %arg1, %c0_i32, %c0_i32_0 : i32, i32, i32
  }
  func.func @transform_9(%arg0: i32, %arg1: i32) -> (i32, i32, i32) {
    %c0_i32 = arith.constant 0 : i32
    %c0_i32_0 = arith.constant 0 : i32
    %c0_i32_1 = arith.constant 0 : i32
    return %arg1, %c0_i32, %c0_i32_0 : i32, i32, i32
  }
  func.func @transform_10(%arg0: i32, %arg1: i32) -> (i32, i32, i32) {
    %c0_i32 = arith.constant 0 : i32
    %c0_i32_0 = arith.constant 0 : i32
    %c0_i32_1 = arith.constant 0 : i32
    return %arg1, %c0_i32, %c0_i32_0 : i32, i32, i32
  }
  func.func @transform_11(%arg0: i32, %arg1: i32) -> (i32, i32, i32) {
    %c0_i32 = arith.constant 0 : i32
    %c0_i32_0 = arith.constant 0 : i32
    %c0_i32_1 = arith.constant 0 : i32
    return %arg1, %c0_i32, %c0_i32_0 : i32, i32, i32
  }
  func.func @transform_12(%arg0: i32, %arg1: i32) -> (i32, i32) {
    %c0_i32 = arith.constant 0 : i32
    %c0_i32_0 = arith.constant 0 : i32
    %c0_i32_1 = arith.constant 0 : i32
    return %c0_i32, %c0_i32_0 : i32, i32
  }
  func.func @transform_13(%arg0: i32, %arg1: i32) -> (i32, i32) {
    %c0_i32 = arith.constant 0 : i32
    %c0_i32_0 = arith.constant 0 : i32
    %c0_i32_1 = arith.constant 0 : i32
    return %c0_i32, %c0_i32_0 : i32, i32
  }
  func.func @transform_14(%arg0: i32, %arg1: i32) -> (i32, i32) {
    %c0_i32 = arith.constant 0 : i32
    %c0_i32_0 = arith.constant 0 : i32
    %c0_i32_1 = arith.constant 0 : i32
    return %c0_i32, %c0_i32_0 : i32, i32
  }
  func.func @transform_15(%arg0: i32, %arg1: i32) -> (i32, i32) {
    %c0_i32 = arith.constant 0 : i32
    %c0_i32_0 = arith.constant 0 : i32
    %c0_i32_1 = arith.constant 0 : i32
    return %c0_i32, %c0_i32_0 : i32, i32
  }
  func.func @transform_16(%arg0: i32, %arg1: i32) -> (i32, i32) {
    %c0_i32 = arith.constant 0 : i32
    %c0_i32_0 = arith.constant 0 : i32
    return %arg0, %c0_i32 : i32, i32
  }
}

</mosaic_0001>

<llo_original>
// kernel: tpu_custom_call.1
$region0: #{tpu_custom_call.1}
  #allocation0 [shape = 'u32[]', space=smem, size = 0x4, offset = 0x4, fixed_abs, tag = 'smem constant byte address 0x4 - core index']
  #allocation1 [shape = 'u32[144,128]{1,0:T(1,128)}', space=vmem, size = 0x12000, scoped, tag = 'internal scratch']
  #allocation2 [shape = 'f32[8,32]{1,0:T(8,128)}', space=vmem, size = 0x1000, scoped, tag = 'scratch operand']
  %s0 = inlined_call_operand.vmem [shape: f32[16,32], index: 0, kind: input, shape index: {}]
  %s1 = inlined_call_operand.vmem [shape: bf16[2,32,96], index: 1, kind: input, shape index: {}]
  %s2 = inlined_call_operand.vmem [shape: bf16[2,32,32], index: 2, kind: input, shape index: {}]
  %s3 = inlined_call_operand.vmem [shape: f32[2,1,32], index: 3, kind: input, shape index: {}]
  %s4 = inlined_call_operand.vmem [shape: f32[2,1,32], index: 4, kind: input, shape index: {}]
  %s5 = inlined_call_operand.vmem [shape: f32[2,1,32], index: 5, kind: input, shape index: {}]
  %s6 = inlined_call_operand.vmem [shape: f32[2,1,32], index: 6, kind: input, shape index: {}]
  %s7 = inlined_call_operand.vmem [shape: f32[2,1,32], index: 7, kind: input, shape index: {}]
  %s8 = inlined_call_operand.vmem [shape: bf16[2,32,128], index: 8, kind: input, shape index: {}]
  %s9 = inlined_call_operand.vmem [shape: f32[2,1,128], index: 9, kind: input, shape index: {}]
  %s10 = inlined_call_operand.vmem [shape: bf16[2,128,32], index: 10, kind: input, shape index: {}]
  %s11 = inlined_call_operand.vmem [shape: f32[2,1,32], index: 11, kind: input, shape index: {}]
  %s12 = inlined_call_operand.vmem [shape: f32[1,32], index: 12, kind: input, shape index: {}]
  %s13 = inlined_call_operand.vmem [shape: f32[1,32], index: 13, kind: input, shape index: {}]
  %s14 = inlined_call_operand.vmem [shape: bf16[32,128], index: 14, kind: input, shape index: {}]
  %s15 = inlined_call_operand.vmem [shape: f32[1,128], index: 15, kind: input, shape index: {}]
  %s16 = inlined_call_operand.hbm [shape: f32[16,128], index: 16, kind: output, shape index: {}]
  %s17 = sld [smem:[#allocation0]]
  $region105: #{tpu_custom_call.1} parent=0
    _
  %s19 = ssub.s32 1, %s17
  %s20 = scalar_select 0, %s19, %s17
  $region1: #{tpu_custom_call.1} parent=0
    #allocation3 [shape = 'u8[8192]{0}', space=vmem, size = 0x2000, scoped, tag = 'output window, operand 0']
    #allocation4 [shape = 's32[2]{0}', space=sflag, size = 0x8, scoped, tag = 'scoped memory for tpu_custom_call.1']
    %21 = vsyncpa [#allocation4], 0
    %s22 = scalar_lea.sflag [#allocation4], 1
    %23 = vsyncpa %s22, 0
    loop: start=0, step=1, limit=6
    $region2: #{tpu_custom_call.1} parent=1 // loop_pre_header
      _
    $region3: #{tpu_custom_call.1} parent=1 // loop_header
      %s25 = sphi 0, %s29
      %p26 = scmp.ge.s32.totalorder %s25, 6
      %s32 = sphi 0, %s44
      %s33 = sphi 0, %s40
      %s34 = sphi 0, %s32
      %s35 = sphi 0, %s33
      %s36 = sphi 0, %s34
      %s37 = sphi 0, %s35
      %s47 = sphi 0, %s49
      %s50 = sphi 0, %s47
      %s51 = sphi 0, %s50
      %s67 = sphi 0, %s51
      %s73 = sphi 0, %s75
      %s76 = sphi 0, %s73
      %s77 = sphi 0, %s76
      %s93 = sphi 0, %s77
      %s99 = sphi 0, %s101
      %s102 = sphi 0, %s99
      %s103 = sphi 0, %s102
      %s119 = sphi 0, %s103
      %s125 = sphi 0, %s127
      %s128 = sphi 0, %s125
      %s129 = sphi 0, %s128
      %s145 = sphi 0, %s129
      %s151 = sphi 0, %s153
      %s154 = sphi 0, %s151
      %s155 = sphi 0, %s154
      %s171 = sphi 0, %s155
      %s177 = sphi 0, %s179
      %s180 = sphi 0, %s177
      %s181 = sphi 0, %s180
      %s197 = sphi 0, %s181
      %s203 = sphi 0, %s205
      %s206 = sphi 0, %s203
      %s207 = sphi 0, %s206
      %s223 = sphi 0, %s207
      %s229 = sphi 0, %s231
      %s232 = sphi 0, %s229
      %s233 = sphi 0, %s232
      %s249 = sphi 0, %s233
      %s255 = sphi 0, %s257
      %s258 = sphi 0, %s255
      %s259 = sphi 0, %s258
      %s275 = sphi 0, %s259
      %s281 = sphi 0, %s283
      %s284 = sphi 0, %s281
      %s285 = sphi 0, %s284
      %s301 = sphi 0, %s285
      %s307 = sphi 0, %s309
      %s310 = sphi 0, %s307
      %s311 = sphi 0, %s310
      %s327 = sphi 0, %s311
      %s333 = sphi 0, %s335
      %s336 = sphi 0, %s333
      %s337 = sphi 0, %s336
      %s353 = sphi 0, %s337
      %s357 = sphi 0, %s357
      %s359 = sphi 0, %s357
      %s360 = sphi 0, %s359
      %s374 = sphi 0, %s360
      %s378 = sphi 0, %s378
      %s380 = sphi 0, %s378
      %s381 = sphi 0, %s380
      %s395 = sphi 0, %s381
      %s399 = sphi 0, %s399
      %s401 = sphi 0, %s399
      %s402 = sphi 0, %s401
      %s416 = sphi 0, %s402
      %s420 = sphi 0, %s420
      %s422 = sphi 0, %s420
      %s423 = sphi 0, %s422
      %s437 = sphi 0, %s423
      %s443 = sphi 0, %s445
      %s446 = sphi 0, %s443
      %s447 = sphi 0, %s446
      %s463 = sphi 0, %s447
    $region4: #{tpu_custom_call.1} parent=1 // loop_header_branch
      %28 = sbr.rel (%p26) target = $region8
    $region5: #{tpu_custom_call.1} parent=1 // loop_body
      %s30 = ssub.s32 %s25, 1
      %s31 = ssub.s32 %s25, 2
      %s38 = sadd.s32 1, %s33
      %p39 = scmp.ge.s32.totalorder %s38, 2
      %s40 = scalar_select %p39, 0, %s38
      %s41 = sadd.s32 1, %s32
      %s42 = scalar_select %p39, %s41, %s32
      %p43 = scmp.ge.s32.totalorder %s42, 2
      %s44 = scalar_select %p43, 0, %s42
      %s45 = ssub.s32 %s32, %s44
      %p46 = scmp.eq.s32.totalorder %s45, 0
      %s48 = sadd.s32 %s47, 1
      %s49 = scalar_select %p46, %s47, %s48
      %p52 = pneg %p46
      %p53 = scmp.eq.s32.totalorder %s25, 3
      %p54 = por %p52, %p53
      %p55 = scmp.ne.s32.totalorder %s47, %s50
      %p56 = scmp.eq.s32.totalorder %s25, 0
      %p57 = por %p55, %p56
      %p58 = scmp.ne.s32.totalorder %s47, %s50
      %p59 = scmp.eq.s32.totalorder %s30, 3
      %p60 = por %p58, %p59
      %p61 = scmp.ne.s32.totalorder %s50, %s51
      %p62 = scmp.eq.s32.totalorder %s30, 0
      %p63 = por %p61, %p62
      %p64 = scmp.ne.s32.totalorder %s50, %s51
      %p65 = scmp.eq.s32.totalorder %s31, 3
      %p66 = por %p64, %p65
      %p68 = scmp.ne.s32.totalorder %s51, %s67
      %p69 = scmp.eq.s32.totalorder %s31, 0
      %p70 = por %p68, %p69
      %s71 = ssub.s32 %s33, %s40
      %p72 = scmp.eq.s32.totalorder %s71, 0
      %s74 = sadd.s32 %s73, 1
      %s75 = scalar_select %p72, %s73, %s74
      %p78 = pneg %p72
      %p79 = scmp.eq.s32.totalorder %s25, 3
      %p80 = por %p78, %p79
      %p81 = scmp.ne.s32.totalorder %s73, %s76
      %p82 = scmp.eq.s32.totalorder %s25, 0
      %p83 = por %p81, %p82
      %p84 = scmp.ne.s32.totalorder %s73, %s76
      %p85 = scmp.eq.s32.totalorder %s30, 3
      %p86 = por %p84, %p85
      %p87 = scmp.ne.s32.totalorder %s76, %s77
      %p88 = scmp.eq.s32.totalorder %s30, 0
      %p89 = por %p87, %p88
      %p90 = scmp.ne.s32.totalorder %s76, %s77
      %p91 = scmp.eq.s32.totalorder %s31, 3
      %p92 = por %p90, %p91
      %p94 = scmp.ne.s32.totalorder %s77, %s93
      %p95 = scmp.eq.s32.totalorder %s31, 0
      %p96 = por %p94, %p95
      %s97 = ssub.s32 %s33, %s40
      %p98 = scmp.eq.s32.totalorder %s97, 0
      %s100 = sadd.s32 %s99, 1
      %s101 = scalar_select %p98, %s99, %s100
      %p104 = pneg %p98
      %p105 = scmp.eq.s32.totalorder %s25, 3
      %p106 = por %p104, %p105
      %p107 = scmp.ne.s32.totalorder %s99, %s102
      %p108 = scmp.eq.s32.totalorder %s25, 0
      %p109 = por %p107, %p108
      %p110 = scmp.ne.s32.totalorder %s99, %s102
      %p111 = scmp.eq.s32.totalorder %s30, 3
      %p112 = por %p110, %p111
      %p113 = scmp.ne.s32.totalorder %s102, %s103
      %p114 = scmp.eq.s32.totalorder %s30, 0
      %p115 = por %p113, %p114
      %p116 = scmp.ne.s32.totalorder %s102, %s103
      %p117 = scmp.eq.s32.totalorder %s31, 3
      %p118 = por %p116, %p117
      %p120 = scmp.ne.s32.totalorder %s103, %s119
      %p121 = scmp.eq.s32.totalorder %s31, 0
      %p122 = por %p120, %p121
      %s123 = ssub.s32 %s33, %s40
      %p124 = scmp.eq.s32.totalorder %s123, 0
      %s126 = sadd.s32 %s125, 1
      %s127 = scalar_select %p124, %s125, %s126
      %p130 = pneg %p124
      %p131 = scmp.eq.s32.totalorder %s25, 3
      %p132 = por %p130, %p131
      %p133 = scmp.ne.s32.totalorder %s125, %s128
      %p134 = scmp.eq.s32.totalorder %s25, 0
      %p135 = por %p133, %p134
      %p136 = scmp.ne.s32.totalorder %s125, %s128
      %p137 = scmp.eq.s32.totalorder %s30, 3
      %p138 = por %p136, %p137
      %p139 = scmp.ne.s32.totalorder %s128, %s129
      %p140 = scmp.eq.s32.totalorder %s30, 0
      %p141 = por %p139, %p140
      %p142 = scmp.ne.s32.totalorder %s128, %s129
      %p143 = scmp.eq.s32.totalorder %s31, 3
      %p144 = por %p142, %p143
      %p146 = scmp.ne.s32.totalorder %s129, %s145
      %p147 = scmp.eq.s32.totalorder %s31, 0
      %p148 = por %p146, %p147
      %s149 = ssub.s32 %s33, %s40
      %p150 = scmp.eq.s32.totalorder %s149, 0
      %s152 = sadd.s32 %s151, 1
      %s153 = scalar_select %p150, %s151, %s152
      %p156 = pneg %p150
      %p157 = scmp.eq.s32.totalorder %s25, 3
      %p158 = por %p156, %p157
      %p159 = scmp.ne.s32.totalorder %s151, %s154
      %p160 = scmp.eq.s32.totalorder %s25, 0
      %p161 = por %p159, %p160
      %p162 = scmp.ne.s32.totalorder %s151, %s154
      %p163 = scmp.eq.s32.totalorder %s30, 3
      %p164 = por %p162, %p163
      %p165 = scmp.ne.s32.totalorder %s154, %s155
      %p166 = scmp.eq.s32.totalorder %s30, 0
      %p167 = por %p165, %p166
      %p168 = scmp.ne.s32.totalorder %s154, %s155
      %p169 = scmp.eq.s32.totalorder %s31, 3
      %p170 = por %p168, %p169
      %p172 = scmp.ne.s32.totalorder %s155, %s171
      %p173 = scmp.eq.s32.totalorder %s31, 0
      %p174 = por %p172, %p173
      %s175 = ssub.s32 %s33, %s40
      %p176 = scmp.eq.s32.totalorder %s175, 0
      %s178 = sadd.s32 %s177, 1
      %s179 = scalar_select %p176, %s177, %s178
      %p182 = pneg %p176
      %p183 = scmp.eq.s32.totalorder %s25, 3
      %p184 = por %p182, %p183
      %p185 = scmp.ne.s32.totalorder %s177, %s180
      %p186 = scmp.eq.s32.totalorder %s25, 0
      %p187 = por %p185, %p186
      %p188 = scmp.ne.s32.totalorder %s177, %s180
      %p189 = scmp.eq.s32.totalorder %s30, 3
      %p190 = por %p188, %p189
      %p191 = scmp.ne.s32.totalorder %s180, %s181
      %p192 = scmp.eq.s32.totalorder %s30, 0
      %p193 = por %p191, %p192
      %p194 = scmp.ne.s32.totalorder %s180, %s181
      %p195 = scmp.eq.s32.totalorder %s31, 3
      %p196 = por %p194, %p195
      %p198 = scmp.ne.s32.totalorder %s181, %s197
      %p199 = scmp.eq.s32.totalorder %s31, 0
      %p200 = por %p198, %p199
      %s201 = ssub.s32 %s33, %s40
      %p202 = scmp.eq.s32.totalorder %s201, 0
      %s204 = sadd.s32 %s203, 1
      %s205 = scalar_select %p202, %s203, %s204
      %p208 = pneg %p202
      %p209 = scmp.eq.s32.totalorder %s25, 3
      %p210 = por %p208, %p209
      %p211 = scmp.ne.s32.totalorder %s203, %s206
      %p212 = scmp.eq.s32.totalorder %s25, 0
      %p213 = por %p211, %p212
      %p214 = scmp.ne.s32.totalorder %s203, %s206
      %p215 = scmp.eq.s32.totalorder %s30, 3
      %p216 = por %p214, %p215
      %p217 = scmp.ne.s32.totalorder %s206, %s207
      %p218 = scmp.eq.s32.totalorder %s30, 0
      %p219 = por %p217, %p218
      %p220 = scmp.ne.s32.totalorder %s206, %s207
      %p221 = scmp.eq.s32.totalorder %s31, 3
      %p222 = por %p220, %p221
      %p224 = scmp.ne.s32.totalorder %s207, %s223
      %p225 = scmp.eq.s32.totalorder %s31, 0
      %p226 = por %p224, %p225
      %s227 = ssub.s32 %s33, %s40
      %p228 = scmp.eq.s32.totalorder %s227, 0
      %s230 = sadd.s32 %s229, 1
      %s231 = scalar_select %p228, %s229, %s230
      %p234 = pneg %p228
      %p235 = scmp.eq.s32.totalorder %s25, 3
      %p236 = por %p234, %p235
      %p237 = scmp.ne.s32.totalorder %s229, %s232
      %p238 = scmp.eq.s32.totalorder %s25, 0
      %p239 = por %p237, %p238
      %p240 = scmp.ne.s32.totalorder %s229, %s232
      %p241 = scmp.eq.s32.totalorder %s30, 3
      %p242 = por %p240, %p241
      %p243 = scmp.ne.s32.totalorder %s232, %s233
      %p244 = scmp.eq.s32.totalorder %s30, 0
      %p245 = por %p243, %p244
      %p246 = scmp.ne.s32.totalorder %s232, %s233
      %p247 = scmp.eq.s32.totalorder %s31, 3
      %p248 = por %p246, %p247
      %p250 = scmp.ne.s32.totalorder %s233, %s249
      %p251 = scmp.eq.s32.totalorder %s31, 0
      %p252 = por %p250, %p251
      %s253 = ssub.s32 %s33, %s40
      %p254 = scmp.eq.s32.totalorder %s253, 0
      %s256 = sadd.s32 %s255, 1
      %s257 = scalar_select %p254, %s255, %s256
      %p260 = pneg %p254
      %p261 = scmp.eq.s32.totalorder %s25, 3
      %p262 = por %p260, %p261
      %p263 = scmp.ne.s32.totalorder %s255, %s258
      %p264 = scmp.eq.s32.totalorder %s25, 0
      %p265 = por %p263, %p264
      %p266 = scmp.ne.s32.totalorder %s255, %s258
      %p267 = scmp.eq.s32.totalorder %s30, 3
      %p268 = por %p266, %p267
      %p269 = scmp.ne.s32.totalorder %s258, %s259
      %p270 = scmp.eq.s32.totalorder %s30, 0
      %p271 = por %p269, %p270
      %p272 = scmp.ne.s32.totalorder %s258, %s259
      %p273 = scmp.eq.s32.totalorder %s31, 3
      %p274 = por %p272, %p273
      %p276 = scmp.ne.s32.totalorder %s259, %s275
      %p277 = scmp.eq.s32.totalorder %s31, 0
      %p278 = por %p276, %p277
      %s279 = ssub.s32 %s33, %s40
      %p280 = scmp.eq.s32.totalorder %s279, 0
      %s282 = sadd.s32 %s281, 1
      %s283 = scalar_select %p280, %s281, %s282
      %p286 = pneg %p280
      %p287 = scmp.eq.s32.totalorder %s25, 3
      %p288 = por %p286, %p287
      %p289 = scmp.ne.s32.totalorder %s281, %s284
      %p290 = scmp.eq.s32.totalorder %s25, 0
      %p291 = por %p289, %p290
      %p292 = scmp.ne.s32.totalorder %s281, %s284
      %p293 = scmp.eq.s32.totalorder %s30, 3
      %p294 = por %p292, %p293
      %p295 = scmp.ne.s32.totalorder %s284, %s285
      %p296 = scmp.eq.s32.totalorder %s30, 0
      %p297 = por %p295, %p296
      %p298 = scmp.ne.s32.totalorder %s284, %s285
      %p299 = scmp.eq.s32.totalorder %s31, 3
      %p300 = por %p298, %p299
      %p302 = scmp.ne.s32.totalorder %s285, %s301
      %p303 = scmp.eq.s32.totalorder %s31, 0
      %p304 = por %p302, %p303
      %s305 = ssub.s32 %s33, %s40
      %p306 = scmp.eq.s32.totalorder %s305, 0
      %s308 = sadd.s32 %s307, 1
      %s309 = scalar_select %p306, %s307, %s308
      %p312 = pneg %p306
      %p313 = scmp.eq.s32.totalorder %s25, 3
      %p314 = por %p312, %p313
      %p315 = scmp.ne.s32.totalorder %s307, %s310
      %p316 = scmp.eq.s32.totalorder %s25, 0
      %p317 = por %p315, %p316
      %p318 = scmp.ne.s32.totalorder %s307, %s310
      %p319 = scmp.eq.s32.totalorder %s30, 3
      %p320 = por %p318, %p319
      %p321 = scmp.ne.s32.totalorder %s310, %s311
      %p322 = scmp.eq.s32.totalorder %s30, 0
      %p323 = por %p321, %p322
      %p324 = scmp.ne.s32.totalorder %s310, %s311
      %p325 = scmp.eq.s32.totalorder %s31, 3
      %p326 = por %p324, %p325
      %p328 = scmp.ne.s32.totalorder %s311, %s327
      %p329 = scmp.eq.s32.totalorder %s31, 0
      %p330 = por %p328, %p329
      %s331 = ssub.s32 %s33, %s40
      %p332 = scmp.eq.s32.totalorder %s331, 0
      %s334 = sadd.s32 %s333, 1
      %s335 = scalar_select %p332, %s333, %s334
      %p338 = pneg %p332
      %p339 = scmp.eq.s32.totalorder %s25, 3
      %p340 = por %p338, %p339
      %p341 = scmp.ne.s32.totalorder %s333, %s336
      %p342 = scmp.eq.s32.totalorder %s25, 0
      %p343 = por %p341, %p342
      %p344 = scmp.ne.s32.totalorder %s333, %s336
      %p345 = scmp.eq.s32.totalorder %s30, 3
      %p346 = por %p344, %p345
      %p347 = scmp.ne.s32.totalorder %s336, %s337
      %p348 = scmp.eq.s32.totalorder %s30, 0
      %p349 = por %p347, %p348
      %p350 = scmp.ne.s32.totalorder %s336, %s337
      %p351 = scmp.eq.s32.totalorder %s31, 3
      %p352 = por %p350, %p351
      %p354 = scmp.ne.s32.totalorder %s337, %s353
      %p355 = scmp.eq.s32.totalorder %s31, 0
      %p356 = por %p354, %p355
      %s358 = sadd.s32 %s357, 1
      %p361 = scmp.eq.s32.totalorder %s25, 3
      %p362 = scmp.ne.s32.totalorder %s357, %s359
      %p363 = scmp.eq.s32.totalorder %s25, 0
      %p364 = por %p362, %p363
      %p365 = scmp.ne.s32.totalorder %s357, %s359
      %p366 = scmp.eq.s32.totalorder %s30, 3
      %p367 = por %p365, %p366
      %p368 = scmp.ne.s32.totalorder %s359, %s360
      %p369 = scmp.eq.s32.totalorder %s30, 0
      %p370 = por %p368, %p369
      %p371 = scmp.ne.s32.totalorder %s359, %s360
      %p372 = scmp.eq.s32.totalorder %s31, 3
      %p373 = por %p371, %p372
      %p375 = scmp.ne.s32.totalorder %s360, %s374
      %p376 = scmp.eq.s32.totalorder %s31, 0
      %p377 = por %p375, %p376
      %s379 = sadd.s32 %s378, 1
      %p382 = scmp.eq.s32.totalorder %s25, 3
      %p383 = scmp.ne.s32.totalorder %s378, %s380
      %p384 = scmp.eq.s32.totalorder %s25, 0
      %p385 = por %p383, %p384
      %p386 = scmp.ne.s32.totalorder %s378, %s380
      %p387 = scmp.eq.s32.totalorder %s30, 3
      %p388 = por %p386, %p387
      %p389 = scmp.ne.s32.totalorder %s380, %s381
      %p390 = scmp.eq.s32.totalorder %s30, 0
      %p391 = por %p389, %p390
      %p392 = scmp.ne.s32.totalorder %s380, %s381
      %p393 = scmp.eq.s32.totalorder %s31, 3
      %p394 = por %p392, %p393
      %p396 = scmp.ne.s32.totalorder %s381, %s395
      %p397 = scmp.eq.s32.totalorder %s31, 0
      %p398 = por %p396, %p397
      %s400 = sadd.s32 %s399, 1
      %p403 = scmp.eq.s32.totalorder %s25, 3
      %p404 = scmp.ne.s32.totalorder %s399, %s401
      %p405 = scmp.eq.s32.totalorder %s25, 0
      %p406 = por %p404, %p405
      %p407 = scmp.ne.s32.totalorder %s399, %s401
      %p408 = scmp.eq.s32.totalorder %s30, 3
      %p409 = por %p407, %p408
      %p410 = scmp.ne.s32.totalorder %s401, %s402
      %p411 = scmp.eq.s32.totalorder %s30, 0
      %p412 = por %p410, %p411
      %p413 = scmp.ne.s32.totalorder %s401, %s402
      %p414 = scmp.eq.s32.totalorder %s31, 3
      %p415 = por %p413, %p414
      %p417 = scmp.ne.s32.totalorder %s402, %s416
      %p418 = scmp.eq.s32.totalorder %s31, 0
      %p419 = por %p417, %p418
      %s421 = sadd.s32 %s420, 1
      %p424 = scmp.eq.s32.totalorder %s25, 3
      %p425 = scmp.ne.s32.totalorder %s420, %s422
      %p426 = scmp.eq.s32.totalorder %s25, 0
      %p427 = por %p425, %p426
      %p428 = scmp.ne.s32.totalorder %s420, %s422
      %p429 = scmp.eq.s32.totalorder %s30, 3
      %p430 = por %p428, %p429
      %p431 = scmp.ne.s32.totalorder %s422, %s423
      %p432 = scmp.eq.s32.totalorder %s30, 0
      %p433 = por %p431, %p432
      %p434 = scmp.ne.s32.totalorder %s422, %s423
      %p435 = scmp.eq.s32.totalorder %s31, 3
      %p436 = por %p434, %p435
      %p438 = scmp.ne.s32.totalorder %s423, %s437
      %p439 = scmp.eq.s32.totalorder %s31, 0
      %p440 = por %p438, %p439
      %s441 = ssub.s32 %s32, %s44
      %p442 = scmp.eq.s32.totalorder %s441, 0
      %s444 = sadd.s32 %s443, 1
      %s445 = scalar_select %p442, %s443, %s444
      %p448 = pneg %p442
      %p449 = scmp.eq.s32.totalorder %s25, 3
      %p450 = por %p448, %p449
      %p451 = scmp.ne.s32.totalorder %s443, %s446
      %p452 = scmp.eq.s32.totalorder %s25, 0
      %p453 = por %p451, %p452
      %p454 = scmp.ne.s32.totalorder %s443, %s446
      %p455 = scmp.eq.s32.totalorder %s30, 3
      %p456 = por %p454, %p455
      %p457 = scmp.ne.s32.totalorder %s446, %s447
      %p458 = scmp.eq.s32.totalorder %s30, 0
      %p459 = por %p457, %p458
      %p460 = scmp.ne.s32.totalorder %s446, %s447
      %p461 = scmp.eq.s32.totalorder %s31, 3
      %p462 = por %p460, %p461
      %p464 = scmp.ne.s32.totalorder %s447, %s463
      %p465 = scmp.eq.s32.totalorder %s31, 0
      %p466 = por %p464, %p465
      %p467 = scmp.le.s32.totalorder 1, %s25
      %p468 = scmp.lt.s32.totalorder %s25, 5
      %p469 = pnand %p467, %p468
      %p470 = pneg %p469
      // Predicated region
      $region9: #{tpu_custom_call.1} parent=5 // pred_check
        _
      $region10: #{tpu_custom_call.1} parent=5 // pred_check_branch
        %472 = sbr.rel (%p469) target = $region12
      $region11: #{tpu_custom_call.1} parent=5 // pred_region
        %s473 = ssub.s32 %s25, 1
        // Predicated region
        $region13: #{tpu_custom_call.1} parent=11 // pred_check
          %p474 = pneg %p370
        $region14: #{tpu_custom_call.1} parent=11 // pred_check_branch
          %476 = sbr.rel (%p474) target = $region16
        $region15: #{tpu_custom_call.1} parent=11 // pred_region
          _
        $region16: #{tpu_custom_call.1} parent=11 // pred_fallthru
          _
        // Predicated region
        $region17: #{tpu_custom_call.1} parent=11 // pred_check
          %p477 = pneg %p391
        $region18: #{tpu_custom_call.1} parent=11 // pred_check_branch
          %479 = sbr.rel (%p477) target = $region20
        $region19: #{tpu_custom_call.1} parent=11 // pred_region
          _
        $region20: #{tpu_custom_call.1} parent=11 // pred_fallthru
          _
        // Predicated region
        $region21: #{tpu_custom_call.1} parent=11 // pred_check
          %p480 = pneg %p412
        $region22: #{tpu_custom_call.1} parent=11 // pred_check_branch
          %482 = sbr.rel (%p480) target = $region24
        $region23: #{tpu_custom_call.1} parent=11 // pred_region
          _
        $region24: #{tpu_custom_call.1} parent=11 // pred_fallthru
          _
        // Predicated region
        $region25: #{tpu_custom_call.1} parent=11 // pred_check
          %p483 = pneg %p433
        $region26: #{tpu_custom_call.1} parent=11 // pred_check_branch
          %485 = sbr.rel (%p483) target = $region28
        $region27: #{tpu_custom_call.1} parent=11 // pred_region
          _
        $region28: #{tpu_custom_call.1} parent=11 // pred_fallthru
          _
      $region12: #{tpu_custom_call.1} parent=5 // pred_fallthru
        _
      %p486 = scmp.lt.s32.totalorder %s25, 4
      // Predicated region
      $region29: #{tpu_custom_call.1} parent=5 // pred_check
        %p487 = pneg %p486
      $region30: #{tpu_custom_call.1} parent=5 // pred_check_branch
        %489 = sbr.rel (%p487) target = $region32
      $region31: #{tpu_custom_call.1} parent=5 // pred_region
        // Predicated region
        $region33: #{tpu_custom_call.1} parent=31 // pred_check
          %p490 = pneg %p57
        $region34: #{tpu_custom_call.1} parent=31 // pred_check_branch
          %492 = sbr.rel (%p490) target = $region36
        $region35: #{tpu_custom_call.1} parent=31 // pred_region
          %p493 = scmp.lt.s32.totalorder %s32, 1
          %s494 = scalar_select %p493, %s32, 1
          %s495 = smul.addr %s494, 8
          %s496 = scalar_lea.vmem %s0, %s495
        $region36: #{tpu_custom_call.1} parent=31 // pred_fallthru
          _
        // Predicated region
        $region37: #{tpu_custom_call.1} parent=31 // pred_check
          %p497 = pneg %p83
        $region38: #{tpu_custom_call.1} parent=31 // pred_check_branch
          %499 = sbr.rel (%p497) target = $region40
        $region39: #{tpu_custom_call.1} parent=31 // pred_region
          %p500 = scmp.lt.s32.totalorder %s33, 1
          %s501 = scalar_select %p500, %s33, 1
          %s502 = smul.addr %s501, 4
          %s503 = smul.addr %s502, 4
          %s504 = scalar_lea.vmem %s1, %s503
        $region40: #{tpu_custom_call.1} parent=31 // pred_fallthru
          _
        // Predicated region
        $region41: #{tpu_custom_call.1} parent=31 // pred_check
          %p505 = pneg %p109
        $region42: #{tpu_custom_call.1} parent=31 // pred_check_branch
          %507 = sbr.rel (%p505) target = $region44
        $region43: #{tpu_custom_call.1} parent=31 // pred_region
          %p508 = scmp.lt.s32.totalorder %s33, 1
          %s509 = scalar_select %p508, %s33, 1
          %s510 = smul.addr %s509, 4
          %s511 = smul.addr %s510, 4
          %s512 = scalar_lea.vmem %s2, %s511
        $region44: #{tpu_custom_call.1} parent=31 // pred_fallthru
          _
        // Predicated region
        $region45: #{tpu_custom_call.1} parent=31 // pred_check
          %p513 = pneg %p135
        $region46: #{tpu_custom_call.1} parent=31 // pred_check_branch
          %515 = sbr.rel (%p513) target = $region48
        $region47: #{tpu_custom_call.1} parent=31 // pred_region
          %p516 = scmp.lt.s32.totalorder %s33, 1
          %s517 = scalar_select %p516, %s33, 1
          %s518 = scalar_lea.vmem %s3, %s517
        $region48: #{tpu_custom_call.1} parent=31 // pred_fallthru
          _
        // Predicated region
        $region49: #{tpu_custom_call.1} parent=31 // pred_check
          %p519 = pneg %p161
        $region50: #{tpu_custom_call.1} parent=31 // pred_check_branch
          %521 = sbr.rel (%p519) target = $region52
        $region51: #{tpu_custom_call.1} parent=31 // pred_region
          %p522 = scmp.lt.s32.totalorder %s33, 1
          %s523 = scalar_select %p522, %s33, 1
          %s524 = scalar_lea.vmem %s4, %s523
        $region52: #{tpu_custom_call.1} parent=31 // pred_fallthru
          _
        // Predicated region
        $region53: #{tpu_custom_call.1} parent=31 // pred_check
          %p525 = pneg %p187
        $region54: #{tpu_custom_call.1} parent=31 // pred_check_branch
          %527 = sbr.rel (%p525) target = $region56
        $region55: #{tpu_custom_call.1} parent=31 // pred_region
          %p528 = scmp.lt.s32.totalorder %s33, 1
          %s529 = scalar_select %p528, %s33, 1
          %s530 = scalar_lea.vmem %s5, %s529
        $region56: #{tpu_custom_call.1} parent=31 // pred_fallthru
          _
        // Predicated region
        $region57: #{tpu_custom_call.1} parent=31 // pred_check
          %p531 = pneg %p213
        $region58: #{tpu_custom_call.1} parent=31 // pred_check_branch
          %533 = sbr.rel (%p531) target = $region60
        $region59: #{tpu_custom_call.1} parent=31 // pred_region
          %p534 = scmp.lt.s32.totalorder %s33, 1
          %s535 = scalar_select %p534, %s33, 1
          %s536 = scalar_lea.vmem %s6, %s535
        $region60: #{tpu_custom_call.1} parent=31 // pred_fallthru
          _
        // Predicated region
        $region61: #{tpu_custom_call.1} parent=31 // pred_check
          %p537 = pneg %p239
        $region62: #{tpu_custom_call.1} parent=31 // pred_check_branch
          %539 = sbr.rel (%p537) target = $region64
        $region63: #{tpu_custom_call.1} parent=31 // pred_region
          %p540 = scmp.lt.s32.totalorder %s33, 1
          %s541 = scalar_select %p540, %s33, 1
          %s542 = scalar_lea.vmem %s7, %s541
        $region64: #{tpu_custom_call.1} parent=31 // pred_fallthru
          _
        // Predicated region
        $region65: #{tpu_custom_call.1} parent=31 // pred_check
          %p543 = pneg %p265
        $region66: #{tpu_custom_call.1} parent=31 // pred_check_branch
          %545 = sbr.rel (%p543) target = $region68
        $region67: #{tpu_custom_call.1} parent=31 // pred_region
          %p546 = scmp.lt.s32.totalorder %s33, 1
          %s547 = scalar_select %p546, %s33, 1
          %s548 = smul.addr %s547, 4
          %s549 = smul.addr %s548, 4
          %s550 = scalar_lea.vmem %s8, %s549
        $region68: #{tpu_custom_call.1} parent=31 // pred_fallthru
          _
        // Predicated region
        $region69: #{tpu_custom_call.1} parent=31 // pred_check
          %p551 = pneg %p291
        $region70: #{tpu_custom_call.1} parent=31 // pred_check_branch
          %553 = sbr.rel (%p551) target = $region72
        $region71: #{tpu_custom_call.1} parent=31 // pred_region
          %p554 = scmp.lt.s32.totalorder %s33, 1
          %s555 = scalar_select %p554, %s33, 1
          %s556 = scalar_lea.vmem %s9, %s555
        $region72: #{tpu_custom_call.1} parent=31 // pred_fallthru
          _
        // Predicated region
        $region73: #{tpu_custom_call.1} parent=31 // pred_check
          %p557 = pneg %p317
        $region74: #{tpu_custom_call.1} parent=31 // pred_check_branch
          %559 = sbr.rel (%p557) target = $region76
        $region75: #{tpu_custom_call.1} parent=31 // pred_region
          %p560 = scmp.lt.s32.totalorder %s33, 1
          %s561 = scalar_select %p560, %s33, 1
          %s562 = smul.addr %s561, 16
          %s563 = smul.addr %s562, 4
          %s564 = scalar_lea.vmem %s10, %s563
        $region76: #{tpu_custom_call.1} parent=31 // pred_fallthru
          _
        // Predicated region
        $region77: #{tpu_custom_call.1} parent=31 // pred_check
          %p565 = pneg %p343
        $region78: #{tpu_custom_call.1} parent=31 // pred_check_branch
          %567 = sbr.rel (%p565) target = $region80
        $region79: #{tpu_custom_call.1} parent=31 // pred_region
          %p568 = scmp.lt.s32.totalorder %s33, 1
          %s569 = scalar_select %p568, %s33, 1
          %s570 = scalar_lea.vmem %s11, %s569
        $region80: #{tpu_custom_call.1} parent=31 // pred_fallthru
          _
      $region32: #{tpu_custom_call.1} parent=5 // pred_fallthru
        _
      %p571 = scmp.le.s32.totalorder 1, %s25
      %p572 = scmp.lt.s32.totalorder %s25, 5
      %p573 = pnand %p571, %p572
      %p574 = pneg %p573
      // Predicated region
      $region81: #{tpu_custom_call.1} parent=5 // pred_check
        _
      $region82: #{tpu_custom_call.1} parent=5 // pred_check_branch
        %576 = sbr.rel (%p573) target = $region84
      $region83: #{tpu_custom_call.1} parent=5 // pred_region
        %s577 = ssub.s32 %s25, 1
        %p578 = scmp.lt.s32.totalorder %s34, 1
        %s579 = scalar_select %p578, %s34, 1
        %s580 = smul.addr %s579, 8
        %s581 = scalar_lea.vmem %s0, %s580
        %p582 = pneg %p63
        %p583 = pneg %p60
        %p584 = scmp.lt.s32.totalorder %s35, 1
        %s585 = scalar_select %p584, %s35, 1
        %s586 = smul.addr %s585, 4
        %s587 = smul.addr %s586, 4
        %s588 = scalar_lea.vmem %s1, %s587
        %p589 = pneg %p89
        %p590 = pneg %p86
        %p591 = scmp.lt.s32.totalorder %s35, 1
        %s592 = scalar_select %p591, %s35, 1
        %s593 = smul.addr %s592, 4
        %s594 = smul.addr %s593, 4
        %s595 = scalar_lea.vmem %s2, %s594
        %p596 = pneg %p115
        %p597 = pneg %p112
        %p598 = scmp.lt.s32.totalorder %s35, 1
        %s599 = scalar_select %p598, %s35, 1
        %s600 = scalar_lea.vmem %s3, %s599
        %p601 = pneg %p141
        %p602 = pneg %p138
        %p603 = scmp.lt.s32.totalorder %s35, 1
        %s604 = scalar_select %p603, %s35, 1
        %s605 = scalar_lea.vmem %s4, %s604
        %p606 = pneg %p167
        %p607 = pneg %p164
        %p608 = scmp.lt.s32.totalorder %s35, 1
        %s609 = scalar_select %p608, %s35, 1
        %s610 = scalar_lea.vmem %s5, %s609
        %p611 = pneg %p193
        %p612 = pneg %p190
        %p613 = scmp.lt.s32.totalorder %s35, 1
        %s614 = scalar_select %p613, %s35, 1
        %s615 = scalar_lea.vmem %s6, %s614
        %p616 = pneg %p219
        %p617 = pneg %p216
        %p618 = scmp.lt.s32.totalorder %s35, 1
        %s619 = scalar_select %p618, %s35, 1
        %s620 = scalar_lea.vmem %s7, %s619
        %p621 = pneg %p245
        %p622 = pneg %p242
        %p623 = scmp.lt.s32.totalorder %s35, 1
        %s624 = scalar_select %p623, %s35, 1
        %s625 = smul.addr %s624, 4
        %s626 = smul.addr %s625, 4
        %s627 = scalar_lea.vmem %s8, %s626
        %p628 = pneg %p271
        %p629 = pneg %p268
        %p630 = scmp.lt.s32.totalorder %s35, 1
        %s631 = scalar_select %p630, %s35, 1
        %s632 = scalar_lea.vmem %s9, %s631
        %p633 = pneg %p297
        %p634 = pneg %p294
        %p635 = scmp.lt.s32.totalorder %s35, 1
        %s636 = scalar_select %p635, %s35, 1
        %s637 = smul.addr %s636, 16
        %s638 = smul.addr %s637, 4
        %s639 = scalar_lea.vmem %s10, %s638
        %p640 = pneg %p323
        %p641 = pneg %p320
        %p642 = scmp.lt.s32.totalorder %s35, 1
        %s643 = scalar_select %p642, %s35, 1
        %s644 = scalar_lea.vmem %s11, %s643
        %p645 = pneg %p349
        %p646 = pneg %p346
        %p647 = pneg %p370
        %p648 = pneg %p367
        %p649 = pneg %p391
        %p650 = pneg %p388
        %p651 = pneg %p412
        %p652 = pneg %p409
        %p653 = pneg %p433
        %p654 = pneg %p430
        %p655 = pneg %p459
        %p656 = pneg %p456
        %s657 = sand.u32 %s446, 1
        %s658 = scalar_lea.sflag [#allocation4], %s657
        %s659 = sand.u32 %s446, 1
        %s660 = smul.addr %s659, 8
        %s661 = scalar_lea.vmem [#allocation3], %s660
        %p662 = scmp.lt.s32.totalorder %s34, 1
        %s663 = scalar_select %p662, %s34, 1
        %s664 = smul.addr %s663, 8
        %s665 = scalar_lea.vmem %s0, %s664
        %p666 = scmp.lt.s32.totalorder %s35, 1
        %s667 = scalar_select %p666, %s35, 1
        %s668 = smul.addr %s667, 4
        %s669 = smul.addr %s668, 4
        %s670 = scalar_lea.vmem %s1, %s669
        %p671 = scmp.lt.s32.totalorder %s35, 1
        %s672 = scalar_select %p671, %s35, 1
        %s673 = smul.addr %s672, 4
        %s674 = smul.addr %s673, 4
        %s675 = scalar_lea.vmem %s2, %s674
        %p676 = scmp.lt.s32.totalorder %s35, 1
        %s677 = scalar_select %p676, %s35, 1
        %s678 = scalar_lea.vmem %s3, %s677
        %p679 = scmp.lt.s32.totalorder %s35, 1
        %s680 = scalar_select %p679, %s35, 1
        %s681 = scalar_lea.vmem %s4, %s680
        %p682 = scmp.lt.s32.totalorder %s35, 1
        %s683 = scalar_select %p682, %s35, 1
        %s684 = scalar_lea.vmem %s5, %s683
        %p685 = scmp.lt.s32.totalorder %s35, 1
        %s686 = scalar_select %p685, %s35, 1
        %s687 = scalar_lea.vmem %s6, %s686
        %p688 = scmp.lt.s32.totalorder %s35, 1
        %s689 = scalar_select %p688, %s35, 1
        %s690 = scalar_lea.vmem %s7, %s689
        %p691 = scmp.lt.s32.totalorder %s35, 1
        %s692 = scalar_select %p691, %s35, 1
        %s693 = smul.addr %s692, 4
        %s694 = smul.addr %s693, 4
        %s695 = scalar_lea.vmem %s8, %s694
        %p696 = scmp.lt.s32.totalorder %s35, 1
        %s697 = scalar_select %p696, %s35, 1
        %s698 = scalar_lea.vmem %s9, %s697
        %p699 = scmp.lt.s32.totalorder %s35, 1
        %s700 = scalar_select %p699, %s35, 1
        %s701 = smul.addr %s700, 16
        %s702 = smul.addr %s701, 4
        %s703 = scalar_lea.vmem %s10, %s702
        %p704 = scmp.lt.s32.totalorder %s35, 1
        %s705 = scalar_select %p704, %s35, 1
        %s706 = scalar_lea.vmem %s11, %s705
        %p708 = scmp.eq.s32.totalorder %s35, 0
        // Predicated region
        $region85: #{tpu_custom_call.1} parent=83 // pred_check
          %p709 = pneg %p708
        $region86: #{tpu_custom_call.1} parent=83 // pred_check_branch
          %711 = sbr.rel (%p709) target = $region88
        $region87: #{tpu_custom_call.1} parent=83 // pred_region
          %v712 = vld [vmem:[%s665] sm:$0xff]
          %vm713 = vcmask 261120
          %714 = vst.msk [vmem:[#allocation2] sm:$0xff] %vm713, %v712
        $region88: #{tpu_custom_call.1} parent=83 // pred_fallthru
          _
        %v715 = vld [vmem:[#allocation2] sm:$0xff]
        %v716 = vlaneseq
        %v717 = vshrl.u32 %v716, 7
        %v718 = vlaneseq
        %v719 = vand.u32 %v718, 127
        %vm720 = vcmp.ge.s32.totalorder %v717, %v719
        %v721 = vld [vmem:[%s681] sm:$0x1]
        %v722 = vld [vmem:[%s684] sm:$0x1]
        %vm723 = vcmask 261120
        %v724 = vsel %vm723, %v715, 0.0
        %725 = vadd.xlane.f32.xlu0 %v724
        %v726 = vpop.xlane.xlu0 %725
        %v727 = vrcp.pop 32.0
        %v728 = vmul.f32 %v726, %v727
        %v729 = vsub.f32 %v715, %v728
        %v730 = vmul.f32 %v729, %v729
        %v731 = vsel %vm723, %v730, 0.0
        %732 = vadd.xlane.f32.xlu0 %v731
        %v733 = vpop.xlane.xlu0 %732
        %v734 = vmul.f32 %v733, %v727
        %v735 = vadd.f32 %v734, 1e-05
        %v736 = vrsqrt.pop %v735
        %v737 = vmul.f32 %v729, %v736
        %v739 = vlaneseq
        %v740 = vshrl.u32 %v739, 7
        %v741 = vsub.s32 0, %v740
        %v742 = vrot.slane %v721, %v741
        %v744 = vmul.f32 %v737, %v742
        %v746 = vlaneseq
        %v747 = vshrl.u32 %v746, 7
        %v748 = vsub.s32 0, %v747
        %v749 = vrot.slane %v722, %v748
        %v751 = vadd.f32 %v744, %v749
        %v752 = vpack.c.bf16 %v751, %v751
        %v753 = vld [vmem:[%s670] sm:$0xf]
        %v754 = vld [vmem:[%s670 + $0x4] sm:$0xf]
        %v755 = vld [vmem:[%s670 + $0x8] sm:$0xf]
        %v756 = vld [vmem:[%s670 + $0xc] sm:$0xf]
        %v761 = vunpack.c.l.b16 %v753
        %v762 = vunpack.c.l.b16 %v754
        %v763 = vunpack.c.l.b16 %v755
        %v764 = vunpack.c.l.b16 %v756
        %v765 = vpack.c.b16 %v762, %v761
        %v766 = vpack.c.b16 %v764, %v763
        %v770 = vsel %vm723, %v752, 0
        %772 = vmatprep.subr.bf16.mxu0 0
        %773 = vmatpush1.bf16.msra.mxu0 %v765
        %774 = vmatprep.subr.bf16.mxu0 0
        %775 = vmatpush1.bf16.msra.mxu0 %v766
        %776 = vmatprep.subr.bf16.mxu0 0
        %777 = vmatpush1.bf16.msra.mxu0 0
        %778 = vmatprep.subr.bf16.mxu0 0
        %779 = vmatpush1.bf16.msra.mxu0 0
        %780 = vmatprep.subr.bf16.mxu0 0
        %781 = vmatpush1.bf16.msra.mxu0 0
        %782 = vmatprep.subr.bf16.mxu0 0
        %783 = vmatpush1.bf16.msra.mxu0 0
        %784 = vmatprep.subr.bf16.mxu0 0
        %785 = vmatpush1.bf16.msra.mxu0 0
        %786 = vmatprep.subr.bf16.mxu0 0
        %787 = vmatpush1.bf16.msra.mxu0 0
        %788 = vmatprep.subr.bf16.mxu0 0
        %789 = vmatpush1.bf16.msra.mxu0 0
        %790 = vmatprep.subr.bf16.mxu0 0
        %791 = vmatpush1.bf16.msra.mxu0 0
        %792 = vmatprep.subr.bf16.mxu0 0
        %793 = vmatpush1.bf16.msra.mxu0 0
        %794 = vmatprep.subr.bf16.mxu0 0
        %795 = vmatpush1.bf16.msra.mxu0 0
        %796 = vmatprep.subr.bf16.mxu0 0
        %797 = vmatpush1.bf16.msra.mxu0 0
        %798 = vmatprep.subr.bf16.mxu0 0
        %799 = vmatpush1.bf16.msra.mxu0 0
        %800 = vmatprep.subr.bf16.mxu0 0
        %801 = vmatpush1.bf16.msra.mxu0 0
        %802 = vmatprep.subr.bf16.mxu0 0
        %803 = vmatpush1.bf16.msra.mxu0 0
        %804 = vmatprep.mubr.bf16.mxu0 0
        %805 = vmatmul.mubr.bf16.gmra.mrb[0].mxu0 %v770
        %v806 = vpop.f32.mrb[0].mxu0
        %v807 = vadd.f32 0.0, %v806
        %v808 = vpop.f32.mrb[0].mxu0
        %v809 = vpop.f32.mrb[0].mxu0
        %v810 = vpop.f32.mrb[0].mxu0
        %811 = vdwg.mxu0
        %v812 = vpack.c.bf16 %v807, %v807
        %814 = vrot.lane.b32.xlu0 %v812, 96
        %v815 = vpop.permute.xlu0 %814
        %vm816 = vcmask 64512
        %v818 = vsel %vm816, %v812, 0
        %v821 = vsel %vm816, %v815, 0
        %823 = vmatprep.subr.bf16.mxu0 0
        %824 = vmatpush1.bf16.xpose.msra.mxu0 %v821
        %825 = vmatprep.subr.bf16.mxu0 0
        %826 = vmatpush1.bf16.xpose.msra.mxu0 0
        %827 = vmatprep.subr.bf16.mxu0 0
        %828 = vmatpush1.bf16.xpose.msra.mxu0 0
        %829 = vmatprep.subr.bf16.mxu0 0
        %830 = vmatpush1.bf16.xpose.msra.mxu0 0
        %831 = vmatprep.subr.bf16.mxu0 0
        %832 = vmatpush1.bf16.xpose.msra.mxu0 0
        %833 = vmatprep.subr.bf16.mxu0 0
        %834 = vmatpush1.bf16.xpose.msra.mxu0 0
        %835 = vmatprep.subr.bf16.mxu0 0
        %836 = vmatpush1.bf16.xpose.msra.mxu0 0
        %837 = vmatprep.subr.bf16.mxu0 0
        %838 = vmatpush1.bf16.xpose.msra.mxu0 0
        %839 = vmatprep.subr.bf16.mxu0 0
        %840 = vmatpush1.bf16.xpose.msra.mxu0 0
        %841 = vmatprep.subr.bf16.mxu0 0
        %842 = vmatpush1.bf16.xpose.msra.mxu0 0
        %843 = vmatprep.subr.bf16.mxu0 0
        %844 = vmatpush1.bf16.xpose.msra.mxu0 0
        %845 = vmatprep.subr.bf16.mxu0 0
        %846 = vmatpush1.bf16.xpose.msra.mxu0 0
        %847 = vmatprep.subr.bf16.mxu0 0
        %848 = vmatpush1.bf16.xpose.msra.mxu0 0
        %849 = vmatprep.subr.bf16.mxu0 0
        %850 = vmatpush1.bf16.xpose.msra.mxu0 0
        %851 = vmatprep.subr.bf16.mxu0 0
        %852 = vmatpush1.bf16.xpose.msra.mxu0 0
        %853 = vmatprep.subr.bf16.mxu0 0
        %854 = vmatpush1.bf16.xpose.msra.mxu0 0
        %855 = vmatprep.mubr.bf16.mxu0 0
        %856 = vmatmul.mubr.bf16.gmra.mrb[0].mxu0 %v818
        %v857 = vpop.f32.mrb[0].mxu0
        %v858 = vadd.f32 0.0, %v857
        %v859 = vpop.f32.mrb[0].mxu0
        %v860 = vpop.f32.mrb[0].mxu0
        %v861 = vpop.f32.mrb[0].mxu0
        %862 = vdwg.mxu0
        %v863 = vsel %vm720, %v858, -1e+30
        %v864 = vsel %vm816, %v863, -inf
        %865 = vmax.xlane.f32.xlu0 %v864
        %v866 = vpop.xlane.xlu0 %865
        %v867 = vsub.f32 %v863, %v866
        %v868 = vmul.f32 %v867, 1.442695
        %v869 = vpow.pop %v868
        %v870 = vsel %vm816, %v869, 0.0
        %871 = vadd.xlane.f32.xlu0 %v870
        %v872 = vpop.xlane.xlu0 %871
        %v873 = vrcp.pop %v872
        %v874 = vmul.f32 %v869, %v873
        %v875 = vpack.c.bf16 %v874, %v874
        %876 = vrot.lane.b32.xlu0 %v812, 64
        %v877 = vpop.permute.xlu0 %876
        %v879 = vsel %vm816, %v875, 0
        %vm881 = vcmask 1043456
        %v883 = vsel %vm881, %v877, 0
        %885 = vmatprep.subr.bf16.mxu0 0
        %886 = vmatpush1.bf16.msra.mxu0 %v883
        %887 = vmatprep.subr.bf16.mxu0 0
        %888 = vmatpush1.bf16.msra.mxu0 0
        %889 = vmatprep.subr.bf16.mxu0 0
        %890 = vmatpush1.bf16.msra.mxu0 0
        %891 = vmatprep.subr.bf16.mxu0 0
        %892 = vmatpush1.bf16.msra.mxu0 0
        %893 = vmatprep.subr.bf16.mxu0 0
        %894 = vmatpush1.bf16.msra.mxu0 0
        %895 = vmatprep.subr.bf16.mxu0 0
        %896 = vmatpush1.bf16.msra.mxu0 0
        %897 = vmatprep.subr.bf16.mxu0 0
        %898 = vmatpush1.bf16.msra.mxu0 0
        %899 = vmatprep.subr.bf16.mxu0 0
        %900 = vmatpush1.bf16.msra.mxu0 0
        %901 = vmatprep.subr.bf16.mxu0 0
        %902 = vmatpush1.bf16.msra.mxu0 0
        %903 = vmatprep.subr.bf16.mxu0 0
        %904 = vmatpush1.bf16.msra.mxu0 0
        %905 = vmatprep.subr.bf16.mxu0 0
        %906 = vmatpush1.bf16.msra.mxu0 0
        %907 = vmatprep.subr.bf16.mxu0 0
        %908 = vmatpush1.bf16.msra.mxu0 0
        %909 = vmatprep.subr.bf16.mxu0 0
        %910 = vmatpush1.bf16.msra.mxu0 0
        %911 = vmatprep.subr.bf16.mxu0 0
        %912 = vmatpush1.bf16.msra.mxu0 0
        %913 = vmatprep.subr.bf16.mxu0 0
        %914 = vmatpush1.bf16.msra.mxu0 0
        %915 = vmatprep.subr.bf16.mxu0 0
        %916 = vmatpush1.bf16.msra.mxu0 0
        %917 = vmatprep.mubr.bf16.mxu0 0
        %918 = vmatmul.mubr.bf16.gmra.mrb[0].mxu0 %v879
        %v919 = vpop.f32.mrb[0].mxu0
        %v920 = vadd.f32 0.0, %v919
        %v921 = vpop.f32.mrb[0].mxu0
        %v922 = vpop.f32.mrb[0].mxu0
        %v923 = vpop.f32.mrb[0].mxu0
        %924 = vdwg.mxu0
        %925 = vrot.lane.b32.xlu0 %v812, 120
        %v926 = vpop.permute.xlu0 %925
        %927 = vrot.lane.b32.xlu0 %v812, 88
        %v928 = vpop.permute.xlu0 %927
        %v930 = vsel %vm816, %v926, 0
        %v933 = vsel %vm816, %v928, 0
        %935 = vmatprep.subr.bf16.mxu0 0
        %936 = vmatpush1.bf16.xpose.msra.mxu0 %v933
        %937 = vmatprep.subr.bf16.mxu0 0
        %938 = vmatpush1.bf16.xpose.msra.mxu0 0
        %939 = vmatprep.subr.bf16.mxu0 0
        %940 = vmatpush1.bf16.xpose.msra.mxu0 0
        %941 = vmatprep.subr.bf16.mxu0 0
        %942 = vmatpush1.bf16.xpose.msra.mxu0 0
        %943 = vmatprep.subr.bf16.mxu0 0
        %944 = vmatpush1.bf16.xpose.msra.mxu0 0
        %945 = vmatprep.subr.bf16.mxu0 0
        %946 = vmatpush1.bf16.xpose.msra.mxu0 0
        %947 = vmatprep.subr.bf16.mxu0 0
        %948 = vmatpush1.bf16.xpose.msra.mxu0 0
        %949 = vmatprep.subr.bf16.mxu0 0
        %950 = vmatpush1.bf16.xpose.msra.mxu0 0
        %951 = vmatprep.subr.bf16.mxu0 0
        %952 = vmatpush1.bf16.xpose.msra.mxu0 0
        %953 = vmatprep.subr.bf16.mxu0 0
        %954 = vmatpush1.bf16.xpose.msra.mxu0 0
        %955 = vmatprep.subr.bf16.mxu0 0
        %956 = vmatpush1.bf16.xpose.msra.mxu0 0
        %957 = vmatprep.subr.bf16.mxu0 0
        %958 = vmatpush1.bf16.xpose.msra.mxu0 0
        %959 = vmatprep.subr.bf16.mxu0 0
        %960 = vmatpush1.bf16.xpose.msra.mxu0 0
        %961 = vmatprep.subr.bf16.mxu0 0
        %962 = vmatpush1.bf16.xpose.msra.mxu0 0
        %963 = vmatprep.subr.bf16.mxu0 0
        %964 = vmatpush1.bf16.xpose.msra.mxu0 0
        %965 = vmatprep.subr.bf16.mxu0 0
        %966 = vmatpush1.bf16.xpose.msra.mxu0 0
        %967 = vmatprep.mubr.bf16.mxu0 0
        %968 = vmatmul.mubr.bf16.gmra.mrb[0].mxu0 %v930
        %v969 = vpop.f32.mrb[0].mxu0
        %v970 = vadd.f32 0.0, %v969
        %v971 = vpop.f32.mrb[0].mxu0
        %v972 = vpop.f32.mrb[0].mxu0
        %v973 = vpop.f32.mrb[0].mxu0
        %974 = vdwg.mxu0
        %v975 = vsel %vm720, %v970, -1e+30
        %v976 = vsel %vm816, %v975, -inf
        %977 = vmax.xlane.f32.xlu0 %v976
        %v978 = vpop.xlane.xlu0 %977
        %v979 = vsub.f32 %v975, %v978
        %v980 = vmul.f32 %v979, 1.442695
        %v981 = vpow.pop %v980
        %v982 = vsel %vm816, %v981, 0.0
        %983 = vadd.xlane.f32.xlu0 %v982
        %v984 = vpop.xlane.xlu0 %983
        %v985 = vrcp.pop %v984
        %v986 = vmul.f32 %v981, %v985
        %v987 = vpack.c.bf16 %v986, %v986
        %988 = vrot.lane.b32.xlu0 %v812, 56
        %v989 = vpop.permute.xlu0 %988
        %v991 = vsel %vm816, %v987, 0
        %v994 = vsel %vm881, %v989, 0
        %996 = vmatprep.subr.bf16.mxu0 0
        %997 = vmatpush1.bf16.msra.mxu0 %v994
        %998 = vmatprep.subr.bf16.mxu0 0
        %999 = vmatpush1.bf16.msra.mxu0 0
        %1000 = vmatprep.subr.bf16.mxu0 0
        %1001 = vmatpush1.bf16.msra.mxu0 0
        %1002 = vmatprep.subr.bf16.mxu0 0
        %1003 = vmatpush1.bf16.msra.mxu0 0
        %1004 = vmatprep.subr.bf16.mxu0 0
        %1005 = vmatpush1.bf16.msra.mxu0 0
        %1006 = vmatprep.subr.bf16.mxu0 0
        %1007 = vmatpush1.bf16.msra.mxu0 0
        %1008 = vmatprep.subr.bf16.mxu0 0
        %1009 = vmatpush1.bf16.msra.mxu0 0
        %1010 = vmatprep.subr.bf16.mxu0 0
        %1011 = vmatpush1.bf16.msra.mxu0 0
        %1012 = vmatprep.subr.bf16.mxu0 0
        %1013 = vmatpush1.bf16.msra.mxu0 0
        %1014 = vmatprep.subr.bf16.mxu0 0
        %1015 = vmatpush1.bf16.msra.mxu0 0
        %1016 = vmatprep.subr.bf16.mxu0 0
        %1017 = vmatpush1.bf16.msra.mxu0 0
        %1018 = vmatprep.subr.bf16.mxu0 0
        %1019 = vmatpush1.bf16.msra.mxu0 0
        %1020 = vmatprep.subr.bf16.mxu0 0
        %1021 = vmatpush1.bf16.msra.mxu0 0
        %1022 = vmatprep.subr.bf16.mxu0 0
        %1023 = vmatpush1.bf16.msra.mxu0 0
        %1024 = vmatprep.subr.bf16.mxu0 0
        %1025 = vmatpush1.bf16.msra.mxu0 0
        %1026 = vmatprep.subr.bf16.mxu0 0
        %1027 = vmatpush1.bf16.msra.mxu0 0
        %1028 = vmatprep.mubr.bf16.mxu0 0
        %1029 = vmatmul.mubr.bf16.gmra.mrb[0].mxu0 %v991
        %v1030 = vpop.f32.mrb[0].mxu0
        %v1031 = vadd.f32 0.0, %v1030
        %v1032 = vpop.f32.mrb[0].mxu0
        %v1033 = vpop.f32.mrb[0].mxu0
        %v1034 = vpop.f32.mrb[0].mxu0
        %1035 = vdwg.mxu0
        %1036 = vrot.lane.b32.xlu0 %v812, 112
        %v1037 = vpop.permute.xlu0 %1036
        %1038 = vrot.lane.b32.xlu0 %v812, 80
        %v1039 = vpop.permute.xlu0 %1038
        %v1041 = vsel %vm816, %v1037, 0
        %v1044 = vsel %vm816, %v1039, 0
        %1046 = vmatprep.subr.bf16.mxu0 0
        %1047 = vmatpush1.bf16.xpose.msra.mxu0 %v1044
        %1048 = vmatprep.subr.bf16.mxu0 0
        %1049 = vmatpush1.bf16.xpose.msra.mxu0 0
        %1050 = vmatprep.subr.bf16.mxu0 0
        %1051 = vmatpush1.bf16.xpose.msra.mxu0 0
        %1052 = vmatprep.subr.bf16.mxu0 0
        %1053 = vmatpush1.bf16.xpose.msra.mxu0 0
        %1054 = vmatprep.subr.bf16.mxu0 0
        %1055 = vmatpush1.bf16.xpose.msra.mxu0 0
        %1056 = vmatprep.subr.bf16.mxu0 0
        %1057 = vmatpush1.bf16.xpose.msra.mxu0 0
        %1058 = vmatprep.subr.bf16.mxu0 0
        %1059 = vmatpush1.bf16.xpose.msra.mxu0 0
        %1060 = vmatprep.subr.bf16.mxu0 0
        %1061 = vmatpush1.bf16.xpose.msra.mxu0 0
        %1062 = vmatprep.subr.bf16.mxu0 0
        %1063 = vmatpush1.bf16.xpose.msra.mxu0 0
        %1064 = vmatprep.subr.bf16.mxu0 0
        %1065 = vmatpush1.bf16.xpose.msra.mxu0 0
        %1066 = vmatprep.subr.bf16.mxu0 0
        %1067 = vmatpush1.bf16.xpose.msra.mxu0 0
        %1068 = vmatprep.subr.bf16.mxu0 0
        %1069 = vmatpush1.bf16.xpose.msra.mxu0 0
        %1070 = vmatprep.subr.bf16.mxu0 0
        %1071 = vmatpush1.bf16.xpose.msra.mxu0 0
        %1072 = vmatprep.subr.bf16.mxu0 0
        %1073 = vmatpush1.bf16.xpose.msra.mxu0 0
        %1074 = vmatprep.subr.bf16.mxu0 0
        %1075 = vmatpush1.bf16.xpose.msra.mxu0 0
        %1076 = vmatprep.subr.bf16.mxu0 0
        %1077 = vmatpush1.bf16.xpose.msra.mxu0 0
        %1078 = vmatprep.mubr.bf16.mxu0 0
        %1079 = vmatmul.mubr.bf16.gmra.mrb[0].mxu0 %v1041
        %v1080 = vpop.f32.mrb[0].mxu0
        %v1081 = vadd.f32 0.0, %v1080
        %v1082 = vpop.f32.mrb[0].mxu0
        %v1083 = vpop.f32.mrb[0].mxu0
        %v1084 = vpop.f32.mrb[0].mxu0
        %1085 = vdwg.mxu0
        %v1086 = vsel %vm720, %v1081, -1e+30
        %v1087 = vsel %vm816, %v1086, -inf
        %1088 = vmax.xlane.f32.xlu0 %v1087
        %v1089 = vpop.xlane.xlu0 %1088
        %v1090 = vsub.f32 %v1086, %v1089
        %v1091 = vmul.f32 %v1090, 1.442695
        %v1092 = vpow.pop %v1091
        %v1093 = vsel %vm816, %v1092, 0.0
        %1094 = vadd.xlane.f32.xlu0 %v1093
        %v1095 = vpop.xlane.xlu0 %1094
        %v1096 = vrcp.pop %v1095
        %v1097 = vmul.f32 %v1092, %v1096
        %v1098 = vpack.c.bf16 %v1097, %v1097
        %1099 = vrot.lane.b32.xlu0 %v812, 48
        %v1100 = vpop.permute.xlu0 %1099
        %v1102 = vsel %vm816, %v1098, 0
        %v1105 = vsel %vm881, %v1100, 0
        %1107 = vmatprep.subr.bf16.mxu0 0
        %1108 = vmatpush1.bf16.msra.mxu0 %v1105
        %1109 = vmatprep.subr.bf16.mxu0 0
        %1110 = vmatpush1.bf16.msra.mxu0 0
        %1111 = vmatprep.subr.bf16.mxu0 0
        %1112 = vmatpush1.bf16.msra.mxu0 0
        %1113 = vmatprep.subr.bf16.mxu0 0
        %1114 = vmatpush1.bf16.msra.mxu0 0
        %1115 = vmatprep.subr.bf16.mxu0 0
        %1116 = vmatpush1.bf16.msra.mxu0 0
        %1117 = vmatprep.subr.bf16.mxu0 0
        %1118 = vmatpush1.bf16.msra.mxu0 0
        %1119 = vmatprep.subr.bf16.mxu0 0
        %1120 = vmatpush1.bf16.msra.mxu0 0
        %1121 = vmatprep.subr.bf16.mxu0 0
        %1122 = vmatpush1.bf16.msra.mxu0 0
        %1123 = vmatprep.subr.bf16.mxu0 0
        %1124 = vmatpush1.bf16.msra.mxu0 0
        %1125 = vmatprep.subr.bf16.mxu0 0
        %1126 = vmatpush1.bf16.msra.mxu0 0
        %1127 = vmatprep.subr.bf16.mxu0 0
        %1128 = vmatpush1.bf16.msra.mxu0 0
        %1129 = vmatprep.subr.bf16.mxu0 0
        %1130 = vmatpush1.bf16.msra.mxu0 0
        %1131 = vmatprep.subr.bf16.mxu0 0
        %1132 = vmatpush1.bf16.msra.mxu0 0
        %1133 = vmatprep.subr.bf16.mxu0 0
        %1134 = vmatpush1.bf16.msra.mxu0 0
        %1135 = vmatprep.subr.bf16.mxu0 0
        %1136 = vmatpush1.bf16.msra.mxu0 0
        %1137 = vmatprep.subr.bf16.mxu0 0
        %1138 = vmatpush1.bf16.msra.mxu0 0
        %1139 = vmatprep.mubr.bf16.mxu0 0
        %1140 = vmatmul.mubr.bf16.gmra.mrb[0].mxu0 %v1102
        %v1141 = vpop.f32.mrb[0].mxu0
        %v1142 = vadd.f32 0.0, %v1141
        %v1143 = vpop.f32.mrb[0].mxu0
        %v1144 = vpop.f32.mrb[0].mxu0
        %v1145 = vpop.f32.mrb[0].mxu0
        %1146 = vdwg.mxu0
        %1147 = vrot.lane.b32.xlu0 %v812, 104
        %v1148 = vpop.permute.xlu0 %1147
        %1149 = vrot.lane.b32.xlu0 %v812, 72
        %v1150 = vpop.permute.xlu0 %1149
        %v1152 = vsel %vm816, %v1148, 0
        %v1155 = vsel %vm816, %v1150, 0
        %1157 = vmatprep.subr.bf16.mxu0 0
        %1158 = vmatpush1.bf16.xpose.msra.mxu0 %v1155
        %1159 = vmatprep.subr.bf16.mxu0 0
        %1160 = vmatpush1.bf16.xpose.msra.mxu0 0
        %1161 = vmatprep.subr.bf16.mxu0 0
        %1162 = vmatpush1.bf16.xpose.msra.mxu0 0
        %1163 = vmatprep.subr.bf16.mxu0 0
        %1164 = vmatpush1.bf16.xpose.msra.mxu0 0
        %1165 = vmatprep.subr.bf16.mxu0 0
        %1166 = vmatpush1.bf16.xpose.msra.mxu0 0
        %1167 = vmatprep.subr.bf16.mxu0 0
        %1168 = vmatpush1.bf16.xpose.msra.mxu0 0
        %1169 = vmatprep.subr.bf16.mxu0 0
        %1170 = vmatpush1.bf16.xpose.msra.mxu0 0
        %1171 = vmatprep.subr.bf16.mxu0 0
        %1172 = vmatpush1.bf16.xpose.msra.mxu0 0
        %1173 = vmatprep.subr.bf16.mxu0 0
        %1174 = vmatpush1.bf16.xpose.msra.mxu0 0
        %1175 = vmatprep.subr.bf16.mxu0 0
        %1176 = vmatpush1.bf16.xpose.msra.mxu0 0
        %1177 = vmatprep.subr.bf16.mxu0 0
        %1178 = vmatpush1.bf16.xpose.msra.mxu0 0
        %1179 = vmatprep.subr.bf16.mxu0 0
        %1180 = vmatpush1.bf16.xpose.msra.mxu0 0
        %1181 = vmatprep.subr.bf16.mxu0 0
        %1182 = vmatpush1.bf16.xpose.msra.mxu0 0
        %1183 = vmatprep.subr.bf16.mxu0 0
        %1184 = vmatpush1.bf16.xpose.msra.mxu0 0
        %1185 = vmatprep.subr.bf16.mxu0 0
        %1186 = vmatpush1.bf16.xpose.msra.mxu0 0
        %1187 = vmatprep.subr.bf16.mxu0 0
        %1188 = vmatpush1.bf16.xpose.msra.mxu0 0
        %1189 = vmatprep.mubr.bf16.mxu0 0
        %1190 = vmatmul.mubr.bf16.gmra.mrb[0].mxu0 %v1152
        %v1191 = vpop.f32.mrb[0].mxu0
        %v1192 = vadd.f32 0.0, %v1191
        %v1193 = vpop.f32.mrb[0].mxu0
        %v1194 = vpop.f32.mrb[0].mxu0
        %v1195 = vpop.f32.mrb[0].mxu0
        %1196 = vdwg.mxu0
        %v1197 = vsel %vm720, %v1192, -1e+30
        %v1198 = vsel %vm816, %v1197, -inf
        %1199 = vmax.xlane.f32.xlu0 %v1198
        %v1200 = vpop.xlane.xlu0 %1199
        %v1201 = vsub.f32 %v1197, %v1200
        %v1202 = vmul.f32 %v1201, 1.442695
        %v1203 = vpow.pop %v1202
        %v1204 = vsel %vm816, %v1203, 0.0
        %1205 = vadd.xlane.f32.xlu0 %v1204
        %v1206 = vpop.xlane.xlu0 %1205
        %v1207 = vrcp.pop %v1206
        %v1208 = vmul.f32 %v1203, %v1207
        %v1209 = vpack.c.bf16 %v1208, %v1208
        %1210 = vrot.lane.b32.xlu0 %v812, 40
        %v1211 = vpop.permute.xlu0 %1210
        %v1213 = vsel %vm816, %v1209, 0
        %v1216 = vsel %vm881, %v1211, 0
        %1218 = vmatprep.subr.bf16.mxu0 0
        %1219 = vmatpush1.bf16.msra.mxu0 %v1216
        %1220 = vmatprep.subr.bf16.mxu0 0
        %1221 = vmatpush1.bf16.msra.mxu0 0
        %1222 = vmatprep.subr.bf16.mxu0 0
        %1223 = vmatpush1.bf16.msra.mxu0 0
        %1224 = vmatprep.subr.bf16.mxu0 0
        %1225 = vmatpush1.bf16.msra.mxu0 0
        %1226 = vmatprep.subr.bf16.mxu0 0
        %1227 = vmatpush1.bf16.msra.mxu0 0
        %1228 = vmatprep.subr.bf16.mxu0 0
        %1229 = vmatpush1.bf16.msra.mxu0 0
        %1230 = vmatprep.subr.bf16.mxu0 0
        %1231 = vmatpush1.bf16.msra.mxu0 0
        %1232 = vmatprep.subr.bf16.mxu0 0
        %1233 = vmatpush1.bf16.msra.mxu0 0
        %1234 = vmatprep.subr.bf16.mxu0 0
        %1235 = vmatpush1.bf16.msra.mxu0 0
        %1236 = vmatprep.subr.bf16.mxu0 0
        %1237 = vmatpush1.bf16.msra.mxu0 0
        %1238 = vmatprep.subr.bf16.mxu0 0
        %1239 = vmatpush1.bf16.msra.mxu0 0
        %1240 = vmatprep.subr.bf16.mxu0 0
        %1241 = vmatpush1.bf16.msra.mxu0 0
        %1242 = vmatprep.subr.bf16.mxu0 0
        %1243 = vmatpush1.bf16.msra.mxu0 0
        %1244 = vmatprep.subr.bf16.mxu0 0
        %1245 = vmatpush1.bf16.msra.mxu0 0
        %1246 = vmatprep.subr.bf16.mxu0 0
        %1247 = vmatpush1.bf16.msra.mxu0 0
        %1248 = vmatprep.subr.bf16.mxu0 0
        %1249 = vmatpush1.bf16.msra.mxu0 0
        %1250 = vmatprep.mubr.bf16.mxu0 0
        %1251 = vmatmul.mubr.bf16.gmra.mrb[0].mxu0 %v1213
        %v1252 = vpop.f32.mrb[0].mxu0
        %v1253 = vadd.f32 0.0, %v1252
        %v1254 = vpop.f32.mrb[0].mxu0
        %v1255 = vpop.f32.mrb[0].mxu0
        %v1256 = vpop.f32.mrb[0].mxu0
        %1257 = vdwg.mxu0
        %1259 = vrot.lane.b32.xlu0 %v1031, 8
        %v1260 = vpop.permute.xlu0 %1259
        %1263 = vrot.lane.b32.xlu0 %v1142, 16
        %v1264 = vpop.permute.xlu0 %1263
        %1267 = vrot.lane.b32.xlu0 %v1253, 24
        %v1268 = vpop.permute.xlu0 %1267
        %v1270 = vsel %vm816, %v920, %v1260
        %vm1271 = vcmask 130048
        %v1272 = vsel %vm1271, %v1270, %v1264
        %vm1273 = vcmask 195584
        %v1274 = vsel %vm1273, %v1272, %v1268
        %v1275 = vpack.c.bf16 %v1274, %v1274
        %v1276 = vld [vmem:[%s675] sm:$0xf]
        %v1277 = vld [vmem:[%s675 + $0x4] sm:$0xf]
        %v1278 = vld [vmem:[%s675 + $0x8] sm:$0xf]
        %v1279 = vld [vmem:[%s675 + $0xc] sm:$0xf]
        %v1280 = vld [vmem:[%s678] sm:$0x1]
        %v1282 = vlaneseq
        %v1283 = vshrl.u32 %v1282, 7
        %v1284 = vsub.s32 0, %v1283
        %v1285 = vrot.slane %v1280, %v1284
        %v1291 = vunpack.c.l.b16 %v1276
        %v1292 = vunpack.c.l.b16 %v1277
        %v1293 = vunpack.c.l.b16 %v1278
        %v1294 = vunpack.c.l.b16 %v1279
        %v1295 = vpack.c.b16 %v1292, %v1291
        %v1296 = vpack.c.b16 %v1294, %v1293
        %v1300 = vsel %vm723, %v1275, 0
        %1302 = vmatprep.subr.bf16.mxu0 0
        %1303 = vmatpush1.bf16.msra.mxu0 %v1295
        %1304 = vmatprep.subr.bf16.mxu0 0
        %1305 = vmatpush1.bf16.msra.mxu0 %v1296
        %1306 = vmatprep.subr.bf16.mxu0 0
        %1307 = vmatpush1.bf16.msra.mxu0 0
        %1308 = vmatprep.subr.bf16.mxu0 0
        %1309 = vmatpush1.bf16.msra.mxu0 0
        %1310 = vmatprep.subr.bf16.mxu0 0
        %1311 = vmatpush1.bf16.msra.mxu0 0
        %1312 = vmatprep.subr.bf16.mxu0 0
        %1313 = vmatpush1.bf16.msra.mxu0 0
        %1314 = vmatprep.subr.bf16.mxu0 0
        %1315 = vmatpush1.bf16.msra.mxu0 0
        %1316 = vmatprep.subr.bf16.mxu0 0
        %1317 = vmatpush1.bf16.msra.mxu0 0
        %1318 = vmatprep.subr.bf16.mxu0 0
        %1319 = vmatpush1.bf16.msra.mxu0 0
        %1320 = vmatprep.subr.bf16.mxu0 0
        %1321 = vmatpush1.bf16.msra.mxu0 0
        %1322 = vmatprep.subr.bf16.mxu0 0
        %1323 = vmatpush1.bf16.msra.mxu0 0
        %1324 = vmatprep.subr.bf16.mxu0 0
        %1325 = vmatpush1.bf16.msra.mxu0 0
        %1326 = vmatprep.subr.bf16.mxu0 0
        %1327 = vmatpush1.bf16.msra.mxu0 0
        %1328 = vmatprep.subr.bf16.mxu0 0
        %1329 = vmatpush1.bf16.msra.mxu0 0
        %1330 = vmatprep.subr.bf16.mxu0 0
        %1331 = vmatpush1.bf16.msra.mxu0 0
        %1332 = vmatprep.subr.bf16.mxu0 0
        %1333 = vmatpush1.bf16.msra.mxu0 0
        %1334 = vmatprep.mubr.bf16.mxu0 0
        %1335 = vmatmul.mubr.bf16.gmra.mrb[0].mxu0 %v1300
        %v1336 = vpop.f32.mrb[0].mxu0
        %v1337 = vadd.f32 %v1285, %v1336
        %v1338 = vpop.f32.mrb[0].mxu0
        %v1339 = vpop.f32.mrb[0].mxu0
        %v1340 = vpop.f32.mrb[0].mxu0
        %1341 = vdwg.mxu0
        %v1342 = vadd.f32 %v715, %v1337
        %v1343 = vld [vmem:[%s687] sm:$0x1]
        %v1344 = vld [vmem:[%s690] sm:$0x1]
        %v1345 = vsel %vm723, %v1342, 0.0
        %1346 = vadd.xlane.f32.xlu0 %v1345
        %v1347 = vpop.xlane.xlu0 %1346
        %v1348 = vmul.f32 %v1347, %v727
        %v1349 = vsub.f32 %v1342, %v1348
        %v1350 = vmul.f32 %v1349, %v1349
        %v1351 = vsel %vm723, %v1350, 0.0
        %1352 = vadd.xlane.f32.xlu0 %v1351
        %v1353 = vpop.xlane.xlu0 %1352
        %v1354 = vmul.f32 %v1353, %v727
        %v1355 = vadd.f32 %v1354, 1e-05
        %v1356 = vrsqrt.pop %v1355
        %v1357 = vmul.f32 %v1349, %v1356
        %v1359 = vlaneseq
        %v1360 = vshrl.u32 %v1359, 7
        %v1361 = vsub.s32 0, %v1360
        %v1362 = vrot.slane %v1343, %v1361
        %v1364 = vmul.f32 %v1357, %v1362
        %v1366 = vlaneseq
        %v1367 = vshrl.u32 %v1366, 7
        %v1368 = vsub.s32 0, %v1367
        %v1369 = vrot.slane %v1344, %v1368
        %v1371 = vadd.f32 %v1364, %v1369
        %v1372 = vpack.c.bf16 %v1371, %v1371
        %v1373 = vld [vmem:[%s695] sm:$0xf]
        %v1374 = vld [vmem:[%s695 + $0x4] sm:$0xf]
        %v1375 = vld [vmem:[%s695 + $0x8] sm:$0xf]
        %v1376 = vld [vmem:[%s695 + $0xc] sm:$0xf]
        %v1377 = vld [vmem:[%s698] sm:$0x1]
        %v1379 = vlaneseq
        %v1380 = vshrl.u32 %v1379, 7
        %v1381 = vsub.s32 0, %v1380
        %v1382 = vrot.slane %v1377, %v1381
        %v1388 = vunpack.c.l.b16 %v1373
        %v1389 = vunpack.c.l.b16 %v1374
        %v1390 = vunpack.c.l.b16 %v1375
        %v1391 = vunpack.c.l.b16 %v1376
        %v1392 = vpack.c.b16 %v1389, %v1388
        %v1393 = vpack.c.b16 %v1391, %v1390
        %v1397 = vsel %vm723, %v1372, 0
        %1399 = vmatprep.subr.bf16.mxu0 0
        %1400 = vmatpush1.bf16.msra.mxu0 %v1392
        %1401 = vmatprep.subr.bf16.mxu0 0
        %1402 = vmatpush1.bf16.msra.mxu0 %v1393
        %1403 = vmatprep.subr.bf16.mxu0 0
        %1404 = vmatpush1.bf16.msra.mxu0 0
        %1405 = vmatprep.subr.bf16.mxu0 0
        %1406 = vmatpush1.bf16.msra.mxu0 0
        %1407 = vmatprep.subr.bf16.mxu0 0
        %1408 = vmatpush1.bf16.msra.mxu0 0
        %1409 = vmatprep.subr.bf16.mxu0 0
        %1410 = vmatpush1.bf16.msra.mxu0 0
        %1411 = vmatprep.subr.bf16.mxu0 0
        %1412 = vmatpush1.bf16.msra.mxu0 0
        %1413 = vmatprep.subr.bf16.mxu0 0
        %1414 = vmatpush1.bf16.msra.mxu0 0
        %1415 = vmatprep.subr.bf16.mxu0 0
        %1416 = vmatpush1.bf16.msra.mxu0 0
        %1417 = vmatprep.subr.bf16.mxu0 0
        %1418 = vmatpush1.bf16.msra.mxu0 0
        %1419 = vmatprep.subr.bf16.mxu0 0
        %1420 = vmatpush1.bf16.msra.mxu0 0
        %1421 = vmatprep.subr.bf16.mxu0 0
        %1422 = vmatpush1.bf16.msra.mxu0 0
        %1423 = vmatprep.subr.bf16.mxu0 0
        %1424 = vmatpush1.bf16.msra.mxu0 0
        %1425 = vmatprep.subr.bf16.mxu0 0
        %1426 = vmatpush1.bf16.msra.mxu0 0
        %1427 = vmatprep.subr.bf16.mxu0 0
        %1428 = vmatpush1.bf16.msra.mxu0 0
        %1429 = vmatprep.subr.bf16.mxu0 0
        %1430 = vmatpush1.bf16.msra.mxu0 0
        %1431 = vmatprep.mubr.bf16.mxu0 0
        %1432 = vmatmul.mubr.bf16.gmra.mrb[0].mxu0 %v1397
        %v1433 = vpop.f32.mrb[0].mxu0
        %v1434 = vadd.f32 %v1382, %v1433
        %v1435 = vpop.f32.mrb[0].mxu0
        %v1436 = vpop.f32.mrb[0].mxu0
        %v1437 = vpop.f32.mrb[0].mxu0
        %1438 = vdwg.mxu0
        %v1439 = vmax.f32 %v1434, 0.0
        %v1440 = vpack.c.bf16 %v1439, %v1439
        %v1441 = vld [vmem:[%s703] sm:$0xf]
        %v1442 = vld [vmem:[%s703 + $0x4] sm:$0xf]
        %v1443 = vld [vmem:[%s703 + $0x8] sm:$0xf]
        %v1444 = vld [vmem:[%s703 + $0xc] sm:$0xf]
        %v1445 = vld [vmem:[%s703 + $0x10] sm:$0xf]
        %v1446 = vld [vmem:[%s703 + $0x14] sm:$0xf]
        %v1447 = vld [vmem:[%s703 + $0x18] sm:$0xf]
        %v1448 = vld [vmem:[%s703 + $0x1c] sm:$0xf]
        %v1449 = vld [vmem:[%s703 + $0x20] sm:$0xf]
        %v1450 = vld [vmem:[%s703 + $0x24] sm:$0xf]
        %v1451 = vld [vmem:[%s703 + $0x28] sm:$0xf]
        %v1452 = vld [vmem:[%s703 + $0x2c] sm:$0xf]
        %v1453 = vld [vmem:[%s703 + $0x30] sm:$0xf]
        %v1454 = vld [vmem:[%s703 + $0x34] sm:$0xf]
        %v1455 = vld [vmem:[%s703 + $0x38] sm:$0xf]
        %v1456 = vld [vmem:[%s703 + $0x3c] sm:$0xf]
        %v1457 = vld [vmem:[%s706] sm:$0x1]
        %v1459 = vlaneseq
        %v1460 = vshrl.u32 %v1459, 7
        %v1461 = vsub.s32 0, %v1460
        %v1462 = vrot.slane %v1457, %v1461
        %v1480 = vunpack.c.l.b16 %v1441
        %v1481 = vunpack.c.l.b16 %v1442
        %v1482 = vunpack.c.l.b16 %v1443
        %v1483 = vunpack.c.l.b16 %v1444
        %v1484 = vunpack.c.l.b16 %v1445
        %v1485 = vunpack.c.l.b16 %v1446
        %v1486 = vunpack.c.l.b16 %v1447
        %v1487 = vunpack.c.l.b16 %v1448
        %v1488 = vunpack.c.l.b16 %v1449
        %v1489 = vunpack.c.l.b16 %v1450
        %v1490 = vunpack.c.l.b16 %v1451
        %v1491 = vunpack.c.l.b16 %v1452
        %v1492 = vunpack.c.l.b16 %v1453
        %v1493 = vunpack.c.l.b16 %v1454
        %v1494 = vunpack.c.l.b16 %v1455
        %v1495 = vunpack.c.l.b16 %v1456
        %v1496 = vpack.c.b16 %v1481, %v1480
        %v1497 = vpack.c.b16 %v1483, %v1482
        %v1498 = vpack.c.b16 %v1485, %v1484
        %v1499 = vpack.c.b16 %v1487, %v1486
        %v1500 = vpack.c.b16 %v1489, %v1488
        %v1501 = vpack.c.b16 %v1491, %v1490
        %v1502 = vpack.c.b16 %v1493, %v1492
        %v1503 = vpack.c.b16 %v1495, %v1494
        %1512 = vmatprep.subr.bf16.mxu0 0
        %1513 = vmatpush1.bf16.msra.mxu0 %v1496
        %1514 = vmatprep.subr.bf16.mxu0 0
        %1515 = vmatpush1.bf16.msra.mxu0 %v1497
        %1516 = vmatprep.subr.bf16.mxu0 0
        %1517 = vmatpush1.bf16.msra.mxu0 %v1498
        %1518 = vmatprep.subr.bf16.mxu0 0
        %1519 = vmatpush1.bf16.msra.mxu0 %v1499
        %1520 = vmatprep.subr.bf16.mxu0 0
        %1521 = vmatpush1.bf16.msra.mxu0 %v1500
        %1522 = vmatprep.subr.bf16.mxu0 0
        %1523 = vmatpush1.bf16.msra.mxu0 %v1501
        %1524 = vmatprep.subr.bf16.mxu0 0
        %1525 = vmatpush1.bf16.msra.mxu0 %v1502
        %1526 = vmatprep.subr.bf16.mxu0 0
        %1527 = vmatpush1.bf16.msra.mxu0 %v1503
        %1528 = vmatprep.subr.bf16.mxu0 0
        %1529 = vmatpush1.bf16.msra.mxu0 0
        %1530 = vmatprep.subr.bf16.mxu0 0
        %1531 = vmatpush1.bf16.msra.mxu0 0
        %1532 = vmatprep.subr.bf16.mxu0 0
        %1533 = vmatpush1.bf16.msra.mxu0 0
        %1534 = vmatprep.subr.bf16.mxu0 0
        %1535 = vmatpush1.bf16.msra.mxu0 0
        %1536 = vmatprep.subr.bf16.mxu0 0
        %1537 = vmatpush1.bf16.msra.mxu0 0
        %1538 = vmatprep.subr.bf16.mxu0 0
        %1539 = vmatpush1.bf16.msra.mxu0 0
        %1540 = vmatprep.subr.bf16.mxu0 0
        %1541 = vmatpush1.bf16.msra.mxu0 0
        %1542 = vmatprep.subr.bf16.mxu0 0
        %1543 = vmatpush1.bf16.msra.mxu0 0
        %1544 = vmatprep.mubr.bf16.mxu0 0
        %1545 = vmatmul.mubr.bf16.gmra.mrb[0].mxu0 %v1440
        %v1546 = vpop.f32.mrb[0].mxu0
        %v1547 = vadd.f32 %v1462, %v1546
        %v1548 = vpop.f32.mrb[0].mxu0
        %v1549 = vpop.f32.mrb[0].mxu0
        %v1550 = vpop.f32.mrb[0].mxu0
        %1551 = vdwg.mxu0
        %v1552 = vadd.f32 %v1342, %v1547
        %1553 = vst.msk [vmem:[#allocation2] sm:$0xff] %vm723, %v1552
        %p1554 = scmp.eq.s32.totalorder %s35, 1
        // Predicated region
        $region89: #{tpu_custom_call.1} parent=83 // pred_check
          %p1555 = pneg %p1554
        $region90: #{tpu_custom_call.1} parent=83 // pred_check_branch
          %1557 = sbr.rel (%p1555) target = $region92
        $region91: #{tpu_custom_call.1} parent=83 // pred_region
          %v1558 = vld [vmem:[%s12] sm:$0x1]
          %v1559 = vld [vmem:[%s13] sm:$0x1]
          %v1560 = vsel %vm723, %v1552, 0.0
          %1561 = vadd.xlane.f32.xlu0 %v1560
          %v1562 = vpop.xlane.xlu0 %1561
          %v1563 = vmul.f32 %v1562, %v727
          %v1564 = vsub.f32 %v1552, %v1563
          %v1565 = vmul.f32 %v1564, %v1564
          %v1566 = vsel %vm723, %v1565, 0.0
          %1567 = vadd.xlane.f32.xlu0 %v1566
          %v1568 = vpop.xlane.xlu0 %1567
          %v1569 = vmul.f32 %v1568, %v727
          %v1570 = vadd.f32 %v1569, 1e-05
          %v1571 = vrsqrt.pop %v1570
          %v1572 = vmul.f32 %v1564, %v1571
          %v1574 = vlaneseq
          %v1575 = vshrl.u32 %v1574, 7
          %v1576 = vsub.s32 0, %v1575
          %v1577 = vrot.slane %v1558, %v1576
          %v1579 = vmul.f32 %v1572, %v1577
          %v1581 = vlaneseq
          %v1582 = vshrl.u32 %v1581, 7
          %v1583 = vsub.s32 0, %v1582
          %v1584 = vrot.slane %v1559, %v1583
          %v1586 = vadd.f32 %v1579, %v1584
          %v1587 = vpack.c.bf16 %v1586, %v1586
          %v1588 = vld [vmem:[%s14] sm:$0xf]
          %v1589 = vld [vmem:[%s14 + $0x4] sm:$0xf]
          %v1590 = vld [vmem:[%s14 + $0x8] sm:$0xf]
          %v1591 = vld [vmem:[%s14 + $0xc] sm:$0xf]
          %v1592 = vld [vmem:[%s15] sm:$0x1]
          %v1594 = vlaneseq
          %v1595 = vshrl.u32 %v1594, 7
          %v1596 = vsub.s32 0, %v1595
          %v1597 = vrot.slane %v1592, %v1596
          %v1603 = vunpack.c.l.b16 %v1588
          %v1604 = vunpack.c.l.b16 %v1589
          %v1605 = vunpack.c.l.b16 %v1590
          %v1606 = vunpack.c.l.b16 %v1591
          %v1607 = vpack.c.b16 %v1604, %v1603
          %v1608 = vpack.c.b16 %v1606, %v1605
          %v1612 = vsel %vm723, %v1587, 0
          %1614 = vmatprep.subr.bf16.mxu0 0
          %1615 = vmatpush1.bf16.msra.mxu0 %v1607
          %1616 = vmatprep.subr.bf16.mxu0 0
          %1617 = vmatpush1.bf16.msra.mxu0 %v1608
          %1618 = vmatprep.subr.bf16.mxu0 0
          %1619 = vmatpush1.bf16.msra.mxu0 0
          %1620 = vmatprep.subr.bf16.mxu0 0
          %1621 = vmatpush1.bf16.msra.mxu0 0
          %1622 = vmatprep.subr.bf16.mxu0 0
          %1623 = vmatpush1.bf16.msra.mxu0 0
          %1624 = vmatprep.subr.bf16.mxu0 0
          %1625 = vmatpush1.bf16.msra.mxu0 0
          %1626 = vmatprep.subr.bf16.mxu0 0
          %1627 = vmatpush1.bf16.msra.mxu0 0
          %1628 = vmatprep.subr.bf16.mxu0 0
          %1629 = vmatpush1.bf16.msra.mxu0 0
          %1630 = vmatprep.subr.bf16.mxu0 0
          %1631 = vmatpush1.bf16.msra.mxu0 0
          %1632 = vmatprep.subr.bf16.mxu0 0
          %1633 = vmatpush1.bf16.msra.mxu0 0
          %1634 = vmatprep.subr.bf16.mxu0 0
          %1635 = vmatpush1.bf16.msra.mxu0 0
          %1636 = vmatprep.subr.bf16.mxu0 0
          %1637 = vmatpush1.bf16.msra.mxu0 0
          %1638 = vmatprep.subr.bf16.mxu0 0
          %1639 = vmatpush1.bf16.msra.mxu0 0
          %1640 = vmatprep.subr.bf16.mxu0 0
          %1641 = vmatpush1.bf16.msra.mxu0 0
          %1642 = vmatprep.subr.bf16.mxu0 0
          %1643 = vmatpush1.bf16.msra.mxu0 0
          %1644 = vmatprep.subr.bf16.mxu0 0
          %1645 = vmatpush1.bf16.msra.mxu0 0
          %1646 = vmatprep.mubr.bf16.mxu0 0
          %1647 = vmatmul.mubr.bf16.gmra.mrb[0].mxu0 %v1612
          %v1648 = vpop.f32.mrb[0].mxu0
          %v1649 = vadd.f32 %v1597, %v1648
          %v1650 = vpop.f32.mrb[0].mxu0
          %v1651 = vpop.f32.mrb[0].mxu0
          %v1652 = vpop.f32.mrb[0].mxu0
          %1653 = vdwg.mxu0
          %1654 = vst [vmem:[%s661] sm:$0xff] %v1649
        $region92: #{tpu_custom_call.1} parent=83 // pred_fallthru
          _
        %s1655 = sand.u32 %s446, 1
        %s1656 = scalar_lea.sflag [#allocation4], %s1655
        %s1657 = sand.u32 %s446, 1
        %s1658 = smul.addr %s1657, 8
        %s1659 = scalar_lea.vmem [#allocation3], %s1658
        // Predicated region
        $region93: #{tpu_custom_call.1} parent=83 // pred_check
          %p1660 = pneg %p456
        $region94: #{tpu_custom_call.1} parent=83 // pred_check_branch
          %1662 = sbr.rel (%p1660) target = $region96
        $region95: #{tpu_custom_call.1} parent=83 // pred_region
          %s1664 = ssub.s32 128, 128
          %1665 = vsyncadd %s1656, %s1664
          %s1666 = smul.addr %s34, 128
          %s1667 = scalar_lea.hbm %s16, %s1666
          %s1669 = sshll.u32 %s1659, 4
          %s1670 = int_to_ptr.vmem [resolvable:$true] %s1669
          %1672 = dma.vmem_to_hbm [thread:$0]  %s1670, 128, %s1667, %s1656
        $region96: #{tpu_custom_call.1} parent=83 // pred_fallthru
          _
      $region84: #{tpu_custom_call.1} parent=5 // pred_fallthru
        _
      %p1673 = scmp.le.s32.totalorder 2, %s25
      // Predicated region
      $region97: #{tpu_custom_call.1} parent=5 // pred_check
        %p1674 = pneg %p1673
      $region98: #{tpu_custom_call.1} parent=5 // pred_check_branch
        %1676 = sbr.rel (%p1674) target = $region100
      $region99: #{tpu_custom_call.1} parent=5 // pred_region
        %s1677 = ssub.s32 %s25, 2
        // Predicated region
        $region101: #{tpu_custom_call.1} parent=99 // pred_check
          %p1678 = pneg %p462
        $region102: #{tpu_custom_call.1} parent=99 // pred_check_branch
          %1680 = sbr.rel (%p1678) target = $region104
        $region103: #{tpu_custom_call.1} parent=99 // pred_region
          %s1681 = sand.u32 %s447, 1
          %s1682 = scalar_lea.sflag [#allocation4], %s1681
          %s1683 = sand.u32 %s447, 1
          %s1684 = smul.addr %s1683, 8
          %s1685 = scalar_lea.vmem [#allocation3], %s1684
          %1686 = dma.done %s1682, 128
        $region104: #{tpu_custom_call.1} parent=99 // pred_fallthru
          _
      $region100: #{tpu_custom_call.1} parent=5 // pred_fallthru
        _
    $region6: #{tpu_custom_call.1} parent=1 // loop_footer
      %s29 = sadd.s32 1, %s25
    $region7: #{tpu_custom_call.1} parent=1 // loop_footer_branch
      %24 = sbr.rel target = $region3
    $region8: #{tpu_custom_call.1} parent=1 // loop_exit
      _
    %1687 = vsyncpa [#allocation4], 1
    %s1688 = scalar_lea.sflag [#allocation4], 1
    %1689 = vsyncpa %s1688, 1

</llo_original>
